<compile_context>
chip_gen: v5e
topology: v5e:2x2
jax: 0.10.0
libtpu: 0.0.40
codegen_flags: <defaults>
</compile_context>

<pallas_src>
import jax
import jax.numpy as jnp
from jax.experimental import pallas as pl
from jax.experimental.pallas import tpu as pltpu

# features_size['8'] = (112, 8, 8)
B, C_IN, H, W = 2, 112, 8, 8
C_HEAD = 1280
NUM_CLASSES = 2
BN_EPS = 1e-3  # EfficientNet BatchNorm epsilon (verify against checkpoint)
MAX_BATCH_TILE = 256  # 256*7168*4B ≈ 7.3 MB/buffer → fits v5e 16 MiB scoped VMEM x2


def _head_kernel(x_ref, w_ref, b_ref, out_ref):
    # x_ref: (TB, C_IN*H*W) flattened NCHW features — fully (8,128)-aligned,
    #        lane-dense (K = 7168 = 56 * 128).
    # Entire conv_head + BN + avg_pool + FC head collapsed into one streaming
    # long-K MXU dot plus a broadcast bias add.
    out_ref[...] = (
        jnp.dot(x_ref[...], w_ref[...], preferred_element_type=jnp.float32)
        + b_ref[...]
    )


def prepare_head_params(conv_w, bn_gamma, bn_beta, bn_mean, bn_var, fc_w, fc_b,
                        spatial):
    """One-time (model-load) weight folding.

    Returns (W_fused, b_fused) with W_fused of shape (C_IN*spatial, NUM_CLASSES)
    so that   logits = x_flat @ W_fused + b_fused
    is exactly  fc(pool(bn(conv1x1(x))))  in eval mode:
        out = pool(x) @ (Wconv * bn_scale) @ Wfc + (bn_shift @ Wfc + bfc)
    and the average pool is absorbed by repeating each channel's row `spatial`
    times along K with the 1/spatial factor pre-multiplied.
    """
    c_head, c_in = conv_w.shape[0], conv_w.shape[1]
    wconv = conv_w.reshape(c_head, c_in).T                    # (C_IN, C_HEAD)
    inv_std = 1.0 / jnp.sqrt(bn_var + BN_EPS)
    scale = bn_gamma * inv_std                                # (C_HEAD,)
    shift = bn_beta - bn_mean * scale                         # (C_HEAD,)
    wfc = fc_w.T                                              # (C_HEAD, NUM_CLASSES)
    w_small = (wconv * scale[None, :]) @ wfc / float(spatial) # (C_IN, NUM_CLASSES)
    # Expand along K so the pool is folded into the matmul: NCHW flatten puts
    # the spatial index fastest, so each channel row repeats `spatial` times.
    w_fused = jnp.repeat(w_small, spatial, axis=0)            # (C_IN*spatial, NC)
    b_fused = shift @ wfc + fc_b                              # (NUM_CLASSES,)
    return (w_fused.astype(jnp.float32),
            b_fused.reshape(1, NUM_CLASSES).astype(jnp.float32))


@jax.jit
def efficient_suppression_head(x_nchw, w_fused, b_fused):
    """x_nchw: (B, C_IN, H, W) block-8 features. Returns (B, NUM_CLASSES) logits.

    Inference-only (eval mode); training-mode dropout / batch-stat BN would
    invalidate the folded weights.
    """
    b = x_nchw.shape[0]
    k = w_fused.shape[0]                                      # C_IN * H * W
    x = x_nchw.reshape(b, k)                                  # free NCHW flatten

    # Batch tiling: single full block for small B, parallel grid for large B.
    tb = b if b <= MAX_BATCH_TILE else MAX_BATCH_TILE
    b_pad = pl.cdiv(b, tb) * tb
    if b_pad != b:
        x = jnp.pad(x, ((0, b_pad - b), (0, 0)))

    itemsize = jnp.dtype(x.dtype).itemsize
    cost = pl.CostEstimate(
        flops=2 * b_pad * k * NUM_CLASSES,
        transcendentals=0,
        bytes_accessed=(b_pad * k * itemsize
                        + k * NUM_CLASSES * 4
                        + NUM_CLASSES * 4
                        + b_pad * NUM_CLASSES * 4),
    )

    out = pl.pallas_call(
        _head_kernel,
        out_shape=jax.ShapeDtypeStruct((b_pad, NUM_CLASSES), jnp.float32),
        grid=(b_pad // tb,),
        in_specs=[
            pl.BlockSpec((tb, k), lambda i: (i, 0)),              # activations
            pl.BlockSpec((k, NUM_CLASSES), lambda i: (0, 0)),     # fused weight
            pl.BlockSpec((1, NUM_CLASSES), lambda i: (0, 0)),     # fused bias
        ],
        out_specs=pl.BlockSpec((tb, NUM_CLASSES), lambda i: (i, 0)),
        compiler_params=pltpu.CompilerParams(
            dimension_semantics=("parallel",)),
        cost_estimate=cost,
    )(x, w_fused, b_fused)
    return out[:b]


def _reference(x_nchw, conv_w, bn_gamma, bn_beta, bn_mean, bn_var, fc_w, fc_b):
    """Unfused reference matching the PyTorch head op-by-op."""
    b, c, h, w = x_nchw.shape
    x_mat = jnp.transpose(x_nchw, (0, 2, 3, 1)).reshape(b * h * w, c)
    y = x_mat @ conv_w.reshape(C_HEAD, c).T                   # 1x1 conv head
    inv_std = 1.0 / jnp.sqrt(bn_var + BN_EPS)
    y = y * (bn_gamma * inv_std) + (bn_beta - bn_mean * bn_gamma * inv_std)
    pooled = y.reshape(b, h * w, C_HEAD).mean(axis=1)         # AdaptiveAvgPool2d(1)
    return pooled @ fc_w.T + fc_b                             # fc (dropout = identity)


if __name__ == "__main__":
    key = jax.random.PRNGKey(0)
    k = jax.random.split(key, 8)

    # Deterministic synthetic parameters (shapes from the module's __init__).
    x = jax.random.normal(k[0], (B, C_IN, H, W), jnp.float32)           # block-8 features
    conv_w = jax.random.normal(k[1], (C_HEAD, C_IN, 1, 1), jnp.float32) * 0.05
    bn_gamma = jax.random.uniform(k[2], (C_HEAD,), jnp.float32, 0.5, 1.5)
    bn_beta = jax.random.normal(k[3], (C_HEAD,), jnp.float32) * 0.1
    bn_mean = jax.random.normal(k[4], (C_HEAD,), jnp.float32) * 0.1
    bn_var = jax.random.uniform(k[5], (C_HEAD,), jnp.float32, 0.5, 1.5)
    fc_w = jax.random.normal(k[6], (NUM_CLASSES, C_HEAD), jnp.float32) * 0.02
    fc_b = jax.random.normal(k[7], (NUM_CLASSES,), jnp.float32) * 0.01

    # TODO(synk): EfficientNet backbone (extract_features_at_block) is not defined
    # in the provided source; the kernel starts from the block-8 feature map.
    # TODO(synk): training-mode dropout (random mask) not implemented — inference only.

    # One-time weight folding (model-load path, not per-call).
    w_fused, b_fused = prepare_head_params(conv_w, bn_gamma, bn_beta, bn_mean,
                                           bn_var, fc_w, fc_b, spatial=H * W)
    w_fused, b_fused = jax.block_until_ready((w_fused, b_fused))

    out = efficient_suppression_head(x, w_fused, b_fused)
    out = jax.block_until_ready(out)

    ref = _reference(x, conv_w, bn_gamma, bn_beta, bn_mean, bn_var, fc_w, fc_b)
    assert out.shape == (B, NUM_CLASSES), out.shape
    assert jnp.allclose(out, ref, rtol=1e-4, atol=1e-4), (out, ref)
    print("KERNEL_OK")
</pallas_src>

<mosaic_0001>
module attributes {stable_mosaic.version = 11 : i64} {
  func.func @_head_kernel(%arg0: i32, %arg1: memref<2x7168xf32, #tpu.memory_space<vmem>>, %arg2: memref<7168x2xf32, #tpu.memory_space<vmem>>, %arg3: memref<1x2xf32, #tpu.memory_space<vmem>>, %arg4: memref<2x2xf32, #tpu.memory_space<vmem>>) attributes {dimension_semantics = [#tpu.dimension_semantics<parallel>], iteration_bounds = array<i64: 1>, scalar_prefetch = 0 : i64, scratch_operands = 0 : i64, tpu.core_type = #tpu.core_type<tc>, window_params = [{transform_indices = @transform_0, window_bounds = array<i64: 2, 7168>}, {pipeline_mode = #tpu.pipeline_mode<synchronous>, transform_indices = @transform_1, window_bounds = array<i64: 7168, 2>}, {pipeline_mode = #tpu.pipeline_mode<synchronous>, transform_indices = @transform_2, window_bounds = array<i64: 1, 2>}, {transform_indices = @transform_3, window_bounds = array<i64: 2, 2>}]} {
    %c0 = arith.constant 0 : index
    %c0_0 = arith.constant 0 : index
    %0 = vector.load %arg1[%c0, %c0_0] : memref<2x7168xf32, #tpu.memory_space<vmem>>, vector<2x7168xf32>
    %c0_1 = arith.constant 0 : index
    %c0_2 = arith.constant 0 : index
    %1 = vector.load %arg2[%c0_1, %c0_2] : memref<7168x2xf32, #tpu.memory_space<vmem>>, vector<7168x2xf32>
    %cst = arith.constant dense<0.000000e+00> : vector<2x2xf32>
    %2 = tpu.matmul %0, %1, %cst {dimension_numbers = #tpu.dot_dimension_numbers<[1], [0], [0], [1], [0, 0, 1, 1], [], []>} : vector<2x7168xf32>, vector<7168x2xf32>, vector<2x2xf32> -> vector<2x2xf32>
    %c0_3 = arith.constant 0 : index
    %c0_4 = arith.constant 0 : index
    %3 = vector.load %arg3[%c0_3, %c0_4] : memref<1x2xf32, #tpu.memory_space<vmem>>, vector<1x2xf32>
    %4 = vector.broadcast %3 : vector<1x2xf32> to vector<2x2xf32>
    %5 = arith.addf %2, %4 : vector<2x2xf32>
    %c0_5 = arith.constant 0 : index
    %c0_6 = arith.constant 0 : index
    %6 = vector.load %arg4[%c0_5, %c0_6] : memref<2x2xf32, #tpu.memory_space<vmem>>, vector<2x2xf32>
    tpu.vector_store %arg4[%c0_5, %c0_6], %5 {strides = array<i32>} : memref<2x2xf32, #tpu.memory_space<vmem>>, vector<2x2xf32>,
    return
  }
  func.func @transform_0(%arg0: i32) -> (i32, i32) {
    %c0_i32 = arith.constant 0 : i32
    %c0_i32_0 = arith.constant 0 : i32
    return %arg0, %c0_i32 : i32, i32
  }
  func.func @transform_1(%arg0: i32) -> (i32, i32) {
    %c0_i32 = arith.constant 0 : i32
    %c0_i32_0 = arith.constant 0 : i32
    %c0_i32_1 = arith.constant 0 : i32
    return %c0_i32, %c0_i32_0 : i32, i32
  }
  func.func @transform_2(%arg0: i32) -> (i32, i32) {
    %c0_i32 = arith.constant 0 : i32
    %c0_i32_0 = arith.constant 0 : i32
    %c0_i32_1 = arith.constant 0 : i32
    return %c0_i32, %c0_i32_0 : i32, i32
  }
  func.func @transform_3(%arg0: i32) -> (i32, i32) {
    %c0_i32 = arith.constant 0 : i32
    %c0_i32_0 = arith.constant 0 : i32
    return %arg0, %c0_i32 : i32, i32
  }
}

</mosaic_0001>

<llo_original>
// kernel: efficient_suppression_head.1
$region0: #{efficient_suppression_head.1}
  #allocation0 [shape = 'u32[]', space=smem, size = 0x4, offset = 0x4, fixed_abs, tag = 'smem constant byte address 0x4 - core index']
  #allocation1 [shape = 'u32[72,128]{1,0:T(1,128)}', space=vmem, size = 0x9000, scoped, tag = 'internal scratch']
  %s0 = inlined_call_operand.vmem [shape: f32[2,7168], index: 0, kind: input, shape index: {}]
  %s1 = inlined_call_operand.vmem [shape: f32[7168,2], index: 1, kind: input, shape index: {}]
  %s2 = inlined_call_operand.vmem [shape: f32[1,2], index: 2, kind: input, shape index: {}]
  %s3 = inlined_call_operand.hbm [shape: f32[2,2], index: 3, kind: output, shape index: {}]
  %s4 = sld [smem:[#allocation0]]
  $region22: #{efficient_suppression_head.1} parent=0
    _
  %s6 = ssub.s32 1, %s4
  %s7 = scalar_select 0, %s6, %s4
  $region1: #{efficient_suppression_head.1} parent=0
    #allocation2 [shape = 'u8[1024]{0}', space=vmem, size = 0x400, scoped, tag = 'output window, operand 0, single buffered']
    #allocation3 [shape = 's32[1]{0}', space=sflag, size = 0x4, scoped, tag = 'scoped memory for efficient_suppression_head.1']
    %8 = vsyncpa [#allocation3], 0
    // Predicated region
    $region2: #{efficient_suppression_head.1} parent=1 // pred_check
      _
    $region3: #{efficient_suppression_head.1} parent=1 // pred_check_branch
      %10 = sbr.rel (0) target = $region5
    $region4: #{efficient_suppression_head.1} parent=1 // pred_region
      _
    $region5: #{efficient_suppression_head.1} parent=1 // pred_fallthru
      _
    // Predicated region
    $region6: #{efficient_suppression_head.1} parent=1 // pred_check
      _
    $region7: #{efficient_suppression_head.1} parent=1 // pred_check_branch
      %12 = sbr.rel (0) target = $region9
    $region8: #{efficient_suppression_head.1} parent=1 // pred_region
      _
    $region9: #{efficient_suppression_head.1} parent=1 // pred_fallthru
      _
    // Predicated region
    $region10: #{efficient_suppression_head.1} parent=1 // pred_check
      _
    $region11: #{efficient_suppression_head.1} parent=1 // pred_check_branch
      %14 = sbr.rel (0) target = $region13
    $region12: #{efficient_suppression_head.1} parent=1 // pred_region
      _
    $region13: #{efficient_suppression_head.1} parent=1 // pred_fallthru
      _
    %v15 = vld [vmem:[%s0] sm:$0xff]
    %v16 = vld [vmem:[%s0 + $0x8] sm:$0xff]
    %v17 = vld [vmem:[%s0 + $0x10] sm:$0xff]
    %v18 = vld [vmem:[%s0 + $0x18] sm:$0xff]
    %v19 = vld [vmem:[%s0 + $0x20] sm:$0xff]
    %v20 = vld [vmem:[%s0 + $0x28] sm:$0xff]
    %v21 = vld [vmem:[%s0 + $0x30] sm:$0xff]
    %v22 = vld [vmem:[%s0 + $0x38] sm:$0xff]
    %v23 = vld [vmem:[%s0 + $0x40] sm:$0xff]
    %v24 = vld [vmem:[%s0 + $0x48] sm:$0xff]
    %v25 = vld [vmem:[%s0 + $0x50] sm:$0xff]
    %v26 = vld [vmem:[%s0 + $0x58] sm:$0xff]
    %v27 = vld [vmem:[%s0 + $0x60] sm:$0xff]
    %v28 = vld [vmem:[%s0 + $0x68] sm:$0xff]
    %v29 = vld [vmem:[%s1] sm:$0xff]
    %v30 = vld [vmem:[%s1 + $0x8] sm:$0xff]
    %v31 = vld [vmem:[%s1 + $0x10] sm:$0xff]
    %v32 = vld [vmem:[%s1 + $0x18] sm:$0xff]
    %v33 = vld [vmem:[%s1 + $0x20] sm:$0xff]
    %v34 = vld [vmem:[%s1 + $0x28] sm:$0xff]
    %v35 = vld [vmem:[%s1 + $0x30] sm:$0xff]
    %v36 = vld [vmem:[%s1 + $0x38] sm:$0xff]
    %v37 = vld [vmem:[%s1 + $0x40] sm:$0xff]
    %v38 = vld [vmem:[%s1 + $0x48] sm:$0xff]
    %v39 = vld [vmem:[%s1 + $0x50] sm:$0xff]
    %v40 = vld [vmem:[%s1 + $0x58] sm:$0xff]
    %v41 = vld [vmem:[%s1 + $0x60] sm:$0xff]
    %v42 = vld [vmem:[%s1 + $0x68] sm:$0xff]
    %v43 = vld [vmem:[%s1 + $0x70] sm:$0xff]
    %v44 = vld [vmem:[%s1 + $0x78] sm:$0xff]
    %v45 = vld [vmem:[%s1 + $0x80] sm:$0xff]
    %v46 = vld [vmem:[%s1 + $0x88] sm:$0xff]
    %v47 = vld [vmem:[%s1 + $0x90] sm:$0xff]
    %v48 = vld [vmem:[%s1 + $0x98] sm:$0xff]
    %v49 = vld [vmem:[%s1 + $0xa0] sm:$0xff]
    %v50 = vld [vmem:[%s1 + $0xa8] sm:$0xff]
    %v51 = vld [vmem:[%s1 + $0xb0] sm:$0xff]
    %v52 = vld [vmem:[%s1 + $0xb8] sm:$0xff]
    %v53 = vld [vmem:[%s1 + $0xc0] sm:$0xff]
    %v54 = vld [vmem:[%s1 + $0xc8] sm:$0xff]
    %v55 = vld [vmem:[%s1 + $0xd0] sm:$0xff]
    %v56 = vld [vmem:[%s1 + $0xd8] sm:$0xff]
    %v57 = vld [vmem:[%s1 + $0xe0] sm:$0xff]
    %v58 = vld [vmem:[%s1 + $0xe8] sm:$0xff]
    %v59 = vld [vmem:[%s1 + $0xf0] sm:$0xff]
    %v60 = vld [vmem:[%s1 + $0xf8] sm:$0xff]
    %v61 = vld [vmem:[%s1 + $0x100] sm:$0xff]
    %v62 = vld [vmem:[%s1 + $0x108] sm:$0xff]
    %v63 = vld [vmem:[%s1 + $0x110] sm:$0xff]
    %v64 = vld [vmem:[%s1 + $0x118] sm:$0xff]
    %v65 = vld [vmem:[%s1 + $0x120] sm:$0xff]
    %v66 = vld [vmem:[%s1 + $0x128] sm:$0xff]
    %v67 = vld [vmem:[%s1 + $0x130] sm:$0xff]
    %v68 = vld [vmem:[%s1 + $0x138] sm:$0xff]
    %v69 = vld [vmem:[%s1 + $0x140] sm:$0xff]
    %v70 = vld [vmem:[%s1 + $0x148] sm:$0xff]
    %v71 = vld [vmem:[%s1 + $0x150] sm:$0xff]
    %v72 = vld [vmem:[%s1 + $0x158] sm:$0xff]
    %v73 = vld [vmem:[%s1 + $0x160] sm:$0xff]
    %v74 = vld [vmem:[%s1 + $0x168] sm:$0xff]
    %v75 = vld [vmem:[%s1 + $0x170] sm:$0xff]
    %v76 = vld [vmem:[%s1 + $0x178] sm:$0xff]
    %v77 = vld [vmem:[%s1 + $0x180] sm:$0xff]
    %v78 = vld [vmem:[%s1 + $0x188] sm:$0xff]
    %v79 = vld [vmem:[%s1 + $0x190] sm:$0xff]
    %v80 = vld [vmem:[%s1 + $0x198] sm:$0xff]
    %v81 = vld [vmem:[%s1 + $0x1a0] sm:$0xff]
    %v82 = vld [vmem:[%s1 + $0x1a8] sm:$0xff]
    %v83 = vld [vmem:[%s1 + $0x1b0] sm:$0xff]
    %v84 = vld [vmem:[%s1 + $0x1b8] sm:$0xff]
    %v85 = vld [vmem:[%s1 + $0x1c0] sm:$0xff]
    %v86 = vld [vmem:[%s1 + $0x1c8] sm:$0xff]
    %v87 = vld [vmem:[%s1 + $0x1d0] sm:$0xff]
    %v88 = vld [vmem:[%s1 + $0x1d8] sm:$0xff]
    %v89 = vld [vmem:[%s1 + $0x1e0] sm:$0xff]
    %v90 = vld [vmem:[%s1 + $0x1e8] sm:$0xff]
    %v91 = vld [vmem:[%s1 + $0x1f0] sm:$0xff]
    %v92 = vld [vmem:[%s1 + $0x1f8] sm:$0xff]
    %v93 = vld [vmem:[%s1 + $0x200] sm:$0xff]
    %v94 = vld [vmem:[%s1 + $0x208] sm:$0xff]
    %v95 = vld [vmem:[%s1 + $0x210] sm:$0xff]
    %v96 = vld [vmem:[%s1 + $0x218] sm:$0xff]
    %v97 = vld [vmem:[%s1 + $0x220] sm:$0xff]
    %v98 = vld [vmem:[%s1 + $0x228] sm:$0xff]
    %v99 = vld [vmem:[%s1 + $0x230] sm:$0xff]
    %v100 = vld [vmem:[%s1 + $0x238] sm:$0xff]
    %v101 = vld [vmem:[%s1 + $0x240] sm:$0xff]
    %v102 = vld [vmem:[%s1 + $0x248] sm:$0xff]
    %v103 = vld [vmem:[%s1 + $0x250] sm:$0xff]
    %v104 = vld [vmem:[%s1 + $0x258] sm:$0xff]
    %v105 = vld [vmem:[%s1 + $0x260] sm:$0xff]
    %v106 = vld [vmem:[%s1 + $0x268] sm:$0xff]
    %v107 = vld [vmem:[%s1 + $0x270] sm:$0xff]
    %v108 = vld [vmem:[%s1 + $0x278] sm:$0xff]
    %v109 = vld [vmem:[%s1 + $0x280] sm:$0xff]
    %v110 = vld [vmem:[%s1 + $0x288] sm:$0xff]
    %v111 = vld [vmem:[%s1 + $0x290] sm:$0xff]
    %v112 = vld [vmem:[%s1 + $0x298] sm:$0xff]
    %v113 = vld [vmem:[%s1 + $0x2a0] sm:$0xff]
    %v114 = vld [vmem:[%s1 + $0x2a8] sm:$0xff]
    %v115 = vld [vmem:[%s1 + $0x2b0] sm:$0xff]
    %v116 = vld [vmem:[%s1 + $0x2b8] sm:$0xff]
    %v117 = vld [vmem:[%s1 + $0x2c0] sm:$0xff]
    %v118 = vld [vmem:[%s1 + $0x2c8] sm:$0xff]
    %v119 = vld [vmem:[%s1 + $0x2d0] sm:$0xff]
    %v120 = vld [vmem:[%s1 + $0x2d8] sm:$0xff]
    %v121 = vld [vmem:[%s1 + $0x2e0] sm:$0xff]
    %v122 = vld [vmem:[%s1 + $0x2e8] sm:$0xff]
    %v123 = vld [vmem:[%s1 + $0x2f0] sm:$0xff]
    %v124 = vld [vmem:[%s1 + $0x2f8] sm:$0xff]
    %v125 = vld [vmem:[%s1 + $0x300] sm:$0xff]
    %v126 = vld [vmem:[%s1 + $0x308] sm:$0xff]
    %v127 = vld [vmem:[%s1 + $0x310] sm:$0xff]
    %v128 = vld [vmem:[%s1 + $0x318] sm:$0xff]
    %v129 = vld [vmem:[%s1 + $0x320] sm:$0xff]
    %v130 = vld [vmem:[%s1 + $0x328] sm:$0xff]
    %v131 = vld [vmem:[%s1 + $0x330] sm:$0xff]
    %v132 = vld [vmem:[%s1 + $0x338] sm:$0xff]
    %v133 = vld [vmem:[%s1 + $0x340] sm:$0xff]
    %v134 = vld [vmem:[%s1 + $0x348] sm:$0xff]
    %v135 = vld [vmem:[%s1 + $0x350] sm:$0xff]
    %v136 = vld [vmem:[%s1 + $0x358] sm:$0xff]
    %v137 = vld [vmem:[%s1 + $0x360] sm:$0xff]
    %v138 = vld [vmem:[%s1 + $0x368] sm:$0xff]
    %v139 = vld [vmem:[%s1 + $0x370] sm:$0xff]
    %v140 = vld [vmem:[%s1 + $0x378] sm:$0xff]
    %v141 = vld [vmem:[%s1 + $0x380] sm:$0xff]
    %v142 = vld [vmem:[%s1 + $0x388] sm:$0xff]
    %v143 = vld [vmem:[%s1 + $0x390] sm:$0xff]
    %v144 = vld [vmem:[%s1 + $0x398] sm:$0xff]
    %v145 = vld [vmem:[%s1 + $0x3a0] sm:$0xff]
    %v146 = vld [vmem:[%s1 + $0x3a8] sm:$0xff]
    %v147 = vld [vmem:[%s1 + $0x3b0] sm:$0xff]
    %v148 = vld [vmem:[%s1 + $0x3b8] sm:$0xff]
    %v149 = vld [vmem:[%s1 + $0x3c0] sm:$0xff]
    %v150 = vld [vmem:[%s1 + $0x3c8] sm:$0xff]
    %v151 = vld [vmem:[%s1 + $0x3d0] sm:$0xff]
    %v152 = vld [vmem:[%s1 + $0x3d8] sm:$0xff]
    %v153 = vld [vmem:[%s1 + $0x3e0] sm:$0xff]
    %v154 = vld [vmem:[%s1 + $0x3e8] sm:$0xff]
    %v155 = vld [vmem:[%s1 + $0x3f0] sm:$0xff]
    %v156 = vld [vmem:[%s1 + $0x3f8] sm:$0xff]
    %v157 = vld [vmem:[%s1 + $0x400] sm:$0xff]
    %v158 = vld [vmem:[%s1 + $0x408] sm:$0xff]
    %v159 = vld [vmem:[%s1 + $0x410] sm:$0xff]
    %v160 = vld [vmem:[%s1 + $0x418] sm:$0xff]
    %v161 = vld [vmem:[%s1 + $0x420] sm:$0xff]
    %v162 = vld [vmem:[%s1 + $0x428] sm:$0xff]
    %v163 = vld [vmem:[%s1 + $0x430] sm:$0xff]
    %v164 = vld [vmem:[%s1 + $0x438] sm:$0xff]
    %v165 = vld [vmem:[%s1 + $0x440] sm:$0xff]
    %v166 = vld [vmem:[%s1 + $0x448] sm:$0xff]
    %v167 = vld [vmem:[%s1 + $0x450] sm:$0xff]
    %v168 = vld [vmem:[%s1 + $0x458] sm:$0xff]
    %v169 = vld [vmem:[%s1 + $0x460] sm:$0xff]
    %v170 = vld [vmem:[%s1 + $0x468] sm:$0xff]
    %v171 = vld [vmem:[%s1 + $0x470] sm:$0xff]
    %v172 = vld [vmem:[%s1 + $0x478] sm:$0xff]
    %v173 = vld [vmem:[%s1 + $0x480] sm:$0xff]
    %v174 = vld [vmem:[%s1 + $0x488] sm:$0xff]
    %v175 = vld [vmem:[%s1 + $0x490] sm:$0xff]
    %v176 = vld [vmem:[%s1 + $0x498] sm:$0xff]
    %v177 = vld [vmem:[%s1 + $0x4a0] sm:$0xff]
    %v178 = vld [vmem:[%s1 + $0x4a8] sm:$0xff]
    %v179 = vld [vmem:[%s1 + $0x4b0] sm:$0xff]
    %v180 = vld [vmem:[%s1 + $0x4b8] sm:$0xff]
    %v181 = vld [vmem:[%s1 + $0x4c0] sm:$0xff]
    %v182 = vld [vmem:[%s1 + $0x4c8] sm:$0xff]
    %v183 = vld [vmem:[%s1 + $0x4d0] sm:$0xff]
    %v184 = vld [vmem:[%s1 + $0x4d8] sm:$0xff]
    %v185 = vld [vmem:[%s1 + $0x4e0] sm:$0xff]
    %v186 = vld [vmem:[%s1 + $0x4e8] sm:$0xff]
    %v187 = vld [vmem:[%s1 + $0x4f0] sm:$0xff]
    %v188 = vld [vmem:[%s1 + $0x4f8] sm:$0xff]
    %v189 = vld [vmem:[%s1 + $0x500] sm:$0xff]
    %v190 = vld [vmem:[%s1 + $0x508] sm:$0xff]
    %v191 = vld [vmem:[%s1 + $0x510] sm:$0xff]
    %v192 = vld [vmem:[%s1 + $0x518] sm:$0xff]
    %v193 = vld [vmem:[%s1 + $0x520] sm:$0xff]
    %v194 = vld [vmem:[%s1 + $0x528] sm:$0xff]
    %v195 = vld [vmem:[%s1 + $0x530] sm:$0xff]
    %v196 = vld [vmem:[%s1 + $0x538] sm:$0xff]
    %v197 = vld [vmem:[%s1 + $0x540] sm:$0xff]
    %v198 = vld [vmem:[%s1 + $0x548] sm:$0xff]
    %v199 = vld [vmem:[%s1 + $0x550] sm:$0xff]
    %v200 = vld [vmem:[%s1 + $0x558] sm:$0xff]
    %v201 = vld [vmem:[%s1 + $0x560] sm:$0xff]
    %v202 = vld [vmem:[%s1 + $0x568] sm:$0xff]
    %v203 = vld [vmem:[%s1 + $0x570] sm:$0xff]
    %v204 = vld [vmem:[%s1 + $0x578] sm:$0xff]
    %v205 = vld [vmem:[%s1 + $0x580] sm:$0xff]
    %v206 = vld [vmem:[%s1 + $0x588] sm:$0xff]
    %v207 = vld [vmem:[%s1 + $0x590] sm:$0xff]
    %v208 = vld [vmem:[%s1 + $0x598] sm:$0xff]
    %v209 = vld [vmem:[%s1 + $0x5a0] sm:$0xff]
    %v210 = vld [vmem:[%s1 + $0x5a8] sm:$0xff]
    %v211 = vld [vmem:[%s1 + $0x5b0] sm:$0xff]
    %v212 = vld [vmem:[%s1 + $0x5b8] sm:$0xff]
    %v213 = vld [vmem:[%s1 + $0x5c0] sm:$0xff]
    %v214 = vld [vmem:[%s1 + $0x5c8] sm:$0xff]
    %v215 = vld [vmem:[%s1 + $0x5d0] sm:$0xff]
    %v216 = vld [vmem:[%s1 + $0x5d8] sm:$0xff]
    %v217 = vld [vmem:[%s1 + $0x5e0] sm:$0xff]
    %v218 = vld [vmem:[%s1 + $0x5e8] sm:$0xff]
    %v219 = vld [vmem:[%s1 + $0x5f0] sm:$0xff]
    %v220 = vld [vmem:[%s1 + $0x5f8] sm:$0xff]
    %v221 = vld [vmem:[%s1 + $0x600] sm:$0xff]
    %v222 = vld [vmem:[%s1 + $0x608] sm:$0xff]
    %v223 = vld [vmem:[%s1 + $0x610] sm:$0xff]
    %v224 = vld [vmem:[%s1 + $0x618] sm:$0xff]
    %v225 = vld [vmem:[%s1 + $0x620] sm:$0xff]
    %v226 = vld [vmem:[%s1 + $0x628] sm:$0xff]
    %v227 = vld [vmem:[%s1 + $0x630] sm:$0xff]
    %v228 = vld [vmem:[%s1 + $0x638] sm:$0xff]
    %v229 = vld [vmem:[%s1 + $0x640] sm:$0xff]
    %v230 = vld [vmem:[%s1 + $0x648] sm:$0xff]
    %v231 = vld [vmem:[%s1 + $0x650] sm:$0xff]
    %v232 = vld [vmem:[%s1 + $0x658] sm:$0xff]
    %v233 = vld [vmem:[%s1 + $0x660] sm:$0xff]
    %v234 = vld [vmem:[%s1 + $0x668] sm:$0xff]
    %v235 = vld [vmem:[%s1 + $0x670] sm:$0xff]
    %v236 = vld [vmem:[%s1 + $0x678] sm:$0xff]
    %v237 = vld [vmem:[%s1 + $0x680] sm:$0xff]
    %v238 = vld [vmem:[%s1 + $0x688] sm:$0xff]
    %v239 = vld [vmem:[%s1 + $0x690] sm:$0xff]
    %v240 = vld [vmem:[%s1 + $0x698] sm:$0xff]
    %v241 = vld [vmem:[%s1 + $0x6a0] sm:$0xff]
    %v242 = vld [vmem:[%s1 + $0x6a8] sm:$0xff]
    %v243 = vld [vmem:[%s1 + $0x6b0] sm:$0xff]
    %v244 = vld [vmem:[%s1 + $0x6b8] sm:$0xff]
    %v245 = vld [vmem:[%s1 + $0x6c0] sm:$0xff]
    %v246 = vld [vmem:[%s1 + $0x6c8] sm:$0xff]
    %v247 = vld [vmem:[%s1 + $0x6d0] sm:$0xff]
    %v248 = vld [vmem:[%s1 + $0x6d8] sm:$0xff]
    %v249 = vld [vmem:[%s1 + $0x6e0] sm:$0xff]
    %v250 = vld [vmem:[%s1 + $0x6e8] sm:$0xff]
    %v251 = vld [vmem:[%s1 + $0x6f0] sm:$0xff]
    %v252 = vld [vmem:[%s1 + $0x6f8] sm:$0xff]
    %v253 = vld [vmem:[%s1 + $0x700] sm:$0xff]
    %v254 = vld [vmem:[%s1 + $0x708] sm:$0xff]
    %v255 = vld [vmem:[%s1 + $0x710] sm:$0xff]
    %v256 = vld [vmem:[%s1 + $0x718] sm:$0xff]
    %v257 = vld [vmem:[%s1 + $0x720] sm:$0xff]
    %v258 = vld [vmem:[%s1 + $0x728] sm:$0xff]
    %v259 = vld [vmem:[%s1 + $0x730] sm:$0xff]
    %v260 = vld [vmem:[%s1 + $0x738] sm:$0xff]
    %v261 = vld [vmem:[%s1 + $0x740] sm:$0xff]
    %v262 = vld [vmem:[%s1 + $0x748] sm:$0xff]
    %v263 = vld [vmem:[%s1 + $0x750] sm:$0xff]
    %v264 = vld [vmem:[%s1 + $0x758] sm:$0xff]
    %v265 = vld [vmem:[%s1 + $0x760] sm:$0xff]
    %v266 = vld [vmem:[%s1 + $0x768] sm:$0xff]
    %v267 = vld [vmem:[%s1 + $0x770] sm:$0xff]
    %v268 = vld [vmem:[%s1 + $0x778] sm:$0xff]
    %v269 = vld [vmem:[%s1 + $0x780] sm:$0xff]
    %v270 = vld [vmem:[%s1 + $0x788] sm:$0xff]
    %v271 = vld [vmem:[%s1 + $0x790] sm:$0xff]
    %v272 = vld [vmem:[%s1 + $0x798] sm:$0xff]
    %v273 = vld [vmem:[%s1 + $0x7a0] sm:$0xff]
    %v274 = vld [vmem:[%s1 + $0x7a8] sm:$0xff]
    %v275 = vld [vmem:[%s1 + $0x7b0] sm:$0xff]
    %v276 = vld [vmem:[%s1 + $0x7b8] sm:$0xff]
    %v277 = vld [vmem:[%s1 + $0x7c0] sm:$0xff]
    %v278 = vld [vmem:[%s1 + $0x7c8] sm:$0xff]
    %v279 = vld [vmem:[%s1 + $0x7d0] sm:$0xff]
    %v280 = vld [vmem:[%s1 + $0x7d8] sm:$0xff]
    %v281 = vld [vmem:[%s1 + $0x7e0] sm:$0xff]
    %v282 = vld [vmem:[%s1 + $0x7e8] sm:$0xff]
    %v283 = vld [vmem:[%s1 + $0x7f0] sm:$0xff]
    %v284 = vld [vmem:[%s1 + $0x7f8] sm:$0xff]
    %v285 = vld [vmem:[%s1 + $0x800] sm:$0xff]
    %v286 = vld [vmem:[%s1 + $0x808] sm:$0xff]
    %v287 = vld [vmem:[%s1 + $0x810] sm:$0xff]
    %v288 = vld [vmem:[%s1 + $0x818] sm:$0xff]
    %v289 = vld [vmem:[%s1 + $0x820] sm:$0xff]
    %v290 = vld [vmem:[%s1 + $0x828] sm:$0xff]
    %v291 = vld [vmem:[%s1 + $0x830] sm:$0xff]
    %v292 = vld [vmem:[%s1 + $0x838] sm:$0xff]
    %v293 = vld [vmem:[%s1 + $0x840] sm:$0xff]
    %v294 = vld [vmem:[%s1 + $0x848] sm:$0xff]
    %v295 = vld [vmem:[%s1 + $0x850] sm:$0xff]
    %v296 = vld [vmem:[%s1 + $0x858] sm:$0xff]
    %v297 = vld [vmem:[%s1 + $0x860] sm:$0xff]
    %v298 = vld [vmem:[%s1 + $0x868] sm:$0xff]
    %v299 = vld [vmem:[%s1 + $0x870] sm:$0xff]
    %v300 = vld [vmem:[%s1 + $0x878] sm:$0xff]
    %v301 = vld [vmem:[%s1 + $0x880] sm:$0xff]
    %v302 = vld [vmem:[%s1 + $0x888] sm:$0xff]
    %v303 = vld [vmem:[%s1 + $0x890] sm:$0xff]
    %v304 = vld [vmem:[%s1 + $0x898] sm:$0xff]
    %v305 = vld [vmem:[%s1 + $0x8a0] sm:$0xff]
    %v306 = vld [vmem:[%s1 + $0x8a8] sm:$0xff]
    %v307 = vld [vmem:[%s1 + $0x8b0] sm:$0xff]
    %v308 = vld [vmem:[%s1 + $0x8b8] sm:$0xff]
    %v309 = vld [vmem:[%s1 + $0x8c0] sm:$0xff]
    %v310 = vld [vmem:[%s1 + $0x8c8] sm:$0xff]
    %v311 = vld [vmem:[%s1 + $0x8d0] sm:$0xff]
    %v312 = vld [vmem:[%s1 + $0x8d8] sm:$0xff]
    %v313 = vld [vmem:[%s1 + $0x8e0] sm:$0xff]
    %v314 = vld [vmem:[%s1 + $0x8e8] sm:$0xff]
    %v315 = vld [vmem:[%s1 + $0x8f0] sm:$0xff]
    %v316 = vld [vmem:[%s1 + $0x8f8] sm:$0xff]
    %v317 = vld [vmem:[%s1 + $0x900] sm:$0xff]
    %v318 = vld [vmem:[%s1 + $0x908] sm:$0xff]
    %v319 = vld [vmem:[%s1 + $0x910] sm:$0xff]
    %v320 = vld [vmem:[%s1 + $0x918] sm:$0xff]
    %v321 = vld [vmem:[%s1 + $0x920] sm:$0xff]
    %v322 = vld [vmem:[%s1 + $0x928] sm:$0xff]
    %v323 = vld [vmem:[%s1 + $0x930] sm:$0xff]
    %v324 = vld [vmem:[%s1 + $0x938] sm:$0xff]
    %v325 = vld [vmem:[%s1 + $0x940] sm:$0xff]
    %v326 = vld [vmem:[%s1 + $0x948] sm:$0xff]
    %v327 = vld [vmem:[%s1 + $0x950] sm:$0xff]
    %v328 = vld [vmem:[%s1 + $0x958] sm:$0xff]
    %v329 = vld [vmem:[%s1 + $0x960] sm:$0xff]
    %v330 = vld [vmem:[%s1 + $0x968] sm:$0xff]
    %v331 = vld [vmem:[%s1 + $0x970] sm:$0xff]
    %v332 = vld [vmem:[%s1 + $0x978] sm:$0xff]
    %v333 = vld [vmem:[%s1 + $0x980] sm:$0xff]
    %v334 = vld [vmem:[%s1 + $0x988] sm:$0xff]
    %v335 = vld [vmem:[%s1 + $0x990] sm:$0xff]
    %v336 = vld [vmem:[%s1 + $0x998] sm:$0xff]
    %v337 = vld [vmem:[%s1 + $0x9a0] sm:$0xff]
    %v338 = vld [vmem:[%s1 + $0x9a8] sm:$0xff]
    %v339 = vld [vmem:[%s1 + $0x9b0] sm:$0xff]
    %v340 = vld [vmem:[%s1 + $0x9b8] sm:$0xff]
    %v341 = vld [vmem:[%s1 + $0x9c0] sm:$0xff]
    %v342 = vld [vmem:[%s1 + $0x9c8] sm:$0xff]
    %v343 = vld [vmem:[%s1 + $0x9d0] sm:$0xff]
    %v344 = vld [vmem:[%s1 + $0x9d8] sm:$0xff]
    %v345 = vld [vmem:[%s1 + $0x9e0] sm:$0xff]
    %v346 = vld [vmem:[%s1 + $0x9e8] sm:$0xff]
    %v347 = vld [vmem:[%s1 + $0x9f0] sm:$0xff]
    %v348 = vld [vmem:[%s1 + $0x9f8] sm:$0xff]
    %v349 = vld [vmem:[%s1 + $0xa00] sm:$0xff]
    %v350 = vld [vmem:[%s1 + $0xa08] sm:$0xff]
    %v351 = vld [vmem:[%s1 + $0xa10] sm:$0xff]
    %v352 = vld [vmem:[%s1 + $0xa18] sm:$0xff]
    %v353 = vld [vmem:[%s1 + $0xa20] sm:$0xff]
    %v354 = vld [vmem:[%s1 + $0xa28] sm:$0xff]
    %v355 = vld [vmem:[%s1 + $0xa30] sm:$0xff]
    %v356 = vld [vmem:[%s1 + $0xa38] sm:$0xff]
    %v357 = vld [vmem:[%s1 + $0xa40] sm:$0xff]
    %v358 = vld [vmem:[%s1 + $0xa48] sm:$0xff]
    %v359 = vld [vmem:[%s1 + $0xa50] sm:$0xff]
    %v360 = vld [vmem:[%s1 + $0xa58] sm:$0xff]
    %v361 = vld [vmem:[%s1 + $0xa60] sm:$0xff]
    %v362 = vld [vmem:[%s1 + $0xa68] sm:$0xff]
    %v363 = vld [vmem:[%s1 + $0xa70] sm:$0xff]
    %v364 = vld [vmem:[%s1 + $0xa78] sm:$0xff]
    %v365 = vld [vmem:[%s1 + $0xa80] sm:$0xff]
    %v366 = vld [vmem:[%s1 + $0xa88] sm:$0xff]
    %v367 = vld [vmem:[%s1 + $0xa90] sm:$0xff]
    %v368 = vld [vmem:[%s1 + $0xa98] sm:$0xff]
    %v369 = vld [vmem:[%s1 + $0xaa0] sm:$0xff]
    %v370 = vld [vmem:[%s1 + $0xaa8] sm:$0xff]
    %v371 = vld [vmem:[%s1 + $0xab0] sm:$0xff]
    %v372 = vld [vmem:[%s1 + $0xab8] sm:$0xff]
    %v373 = vld [vmem:[%s1 + $0xac0] sm:$0xff]
    %v374 = vld [vmem:[%s1 + $0xac8] sm:$0xff]
    %v375 = vld [vmem:[%s1 + $0xad0] sm:$0xff]
    %v376 = vld [vmem:[%s1 + $0xad8] sm:$0xff]
    %v377 = vld [vmem:[%s1 + $0xae0] sm:$0xff]
    %v378 = vld [vmem:[%s1 + $0xae8] sm:$0xff]
    %v379 = vld [vmem:[%s1 + $0xaf0] sm:$0xff]
    %v380 = vld [vmem:[%s1 + $0xaf8] sm:$0xff]
    %v381 = vld [vmem:[%s1 + $0xb00] sm:$0xff]
    %v382 = vld [vmem:[%s1 + $0xb08] sm:$0xff]
    %v383 = vld [vmem:[%s1 + $0xb10] sm:$0xff]
    %v384 = vld [vmem:[%s1 + $0xb18] sm:$0xff]
    %v385 = vld [vmem:[%s1 + $0xb20] sm:$0xff]
    %v386 = vld [vmem:[%s1 + $0xb28] sm:$0xff]
    %v387 = vld [vmem:[%s1 + $0xb30] sm:$0xff]
    %v388 = vld [vmem:[%s1 + $0xb38] sm:$0xff]
    %v389 = vld [vmem:[%s1 + $0xb40] sm:$0xff]
    %v390 = vld [vmem:[%s1 + $0xb48] sm:$0xff]
    %v391 = vld [vmem:[%s1 + $0xb50] sm:$0xff]
    %v392 = vld [vmem:[%s1 + $0xb58] sm:$0xff]
    %v393 = vld [vmem:[%s1 + $0xb60] sm:$0xff]
    %v394 = vld [vmem:[%s1 + $0xb68] sm:$0xff]
    %v395 = vld [vmem:[%s1 + $0xb70] sm:$0xff]
    %v396 = vld [vmem:[%s1 + $0xb78] sm:$0xff]
    %v397 = vld [vmem:[%s1 + $0xb80] sm:$0xff]
    %v398 = vld [vmem:[%s1 + $0xb88] sm:$0xff]
    %v399 = vld [vmem:[%s1 + $0xb90] sm:$0xff]
    %v400 = vld [vmem:[%s1 + $0xb98] sm:$0xff]
    %v401 = vld [vmem:[%s1 + $0xba0] sm:$0xff]
    %v402 = vld [vmem:[%s1 + $0xba8] sm:$0xff]
    %v403 = vld [vmem:[%s1 + $0xbb0] sm:$0xff]
    %v404 = vld [vmem:[%s1 + $0xbb8] sm:$0xff]
    %v405 = vld [vmem:[%s1 + $0xbc0] sm:$0xff]
    %v406 = vld [vmem:[%s1 + $0xbc8] sm:$0xff]
    %v407 = vld [vmem:[%s1 + $0xbd0] sm:$0xff]
    %v408 = vld [vmem:[%s1 + $0xbd8] sm:$0xff]
    %v409 = vld [vmem:[%s1 + $0xbe0] sm:$0xff]
    %v410 = vld [vmem:[%s1 + $0xbe8] sm:$0xff]
    %v411 = vld [vmem:[%s1 + $0xbf0] sm:$0xff]
    %v412 = vld [vmem:[%s1 + $0xbf8] sm:$0xff]
    %v413 = vld [vmem:[%s1 + $0xc00] sm:$0xff]
    %v414 = vld [vmem:[%s1 + $0xc08] sm:$0xff]
    %v415 = vld [vmem:[%s1 + $0xc10] sm:$0xff]
    %v416 = vld [vmem:[%s1 + $0xc18] sm:$0xff]
    %v417 = vld [vmem:[%s1 + $0xc20] sm:$0xff]
    %v418 = vld [vmem:[%s1 + $0xc28] sm:$0xff]
    %v419 = vld [vmem:[%s1 + $0xc30] sm:$0xff]
    %v420 = vld [vmem:[%s1 + $0xc38] sm:$0xff]
    %v421 = vld [vmem:[%s1 + $0xc40] sm:$0xff]
    %v422 = vld [vmem:[%s1 + $0xc48] sm:$0xff]
    %v423 = vld [vmem:[%s1 + $0xc50] sm:$0xff]
    %v424 = vld [vmem:[%s1 + $0xc58] sm:$0xff]
    %v425 = vld [vmem:[%s1 + $0xc60] sm:$0xff]
    %v426 = vld [vmem:[%s1 + $0xc68] sm:$0xff]
    %v427 = vld [vmem:[%s1 + $0xc70] sm:$0xff]
    %v428 = vld [vmem:[%s1 + $0xc78] sm:$0xff]
    %v429 = vld [vmem:[%s1 + $0xc80] sm:$0xff]
    %v430 = vld [vmem:[%s1 + $0xc88] sm:$0xff]
    %v431 = vld [vmem:[%s1 + $0xc90] sm:$0xff]
    %v432 = vld [vmem:[%s1 + $0xc98] sm:$0xff]
    %v433 = vld [vmem:[%s1 + $0xca0] sm:$0xff]
    %v434 = vld [vmem:[%s1 + $0xca8] sm:$0xff]
    %v435 = vld [vmem:[%s1 + $0xcb0] sm:$0xff]
    %v436 = vld [vmem:[%s1 + $0xcb8] sm:$0xff]
    %v437 = vld [vmem:[%s1 + $0xcc0] sm:$0xff]
    %v438 = vld [vmem:[%s1 + $0xcc8] sm:$0xff]
    %v439 = vld [vmem:[%s1 + $0xcd0] sm:$0xff]
    %v440 = vld [vmem:[%s1 + $0xcd8] sm:$0xff]
    %v441 = vld [vmem:[%s1 + $0xce0] sm:$0xff]
    %v442 = vld [vmem:[%s1 + $0xce8] sm:$0xff]
    %v443 = vld [vmem:[%s1 + $0xcf0] sm:$0xff]
    %v444 = vld [vmem:[%s1 + $0xcf8] sm:$0xff]
    %v445 = vld [vmem:[%s1 + $0xd00] sm:$0xff]
    %v446 = vld [vmem:[%s1 + $0xd08] sm:$0xff]
    %v447 = vld [vmem:[%s1 + $0xd10] sm:$0xff]
    %v448 = vld [vmem:[%s1 + $0xd18] sm:$0xff]
    %v449 = vld [vmem:[%s1 + $0xd20] sm:$0xff]
    %v450 = vld [vmem:[%s1 + $0xd28] sm:$0xff]
    %v451 = vld [vmem:[%s1 + $0xd30] sm:$0xff]
    %v452 = vld [vmem:[%s1 + $0xd38] sm:$0xff]
    %v453 = vld [vmem:[%s1 + $0xd40] sm:$0xff]
    %v454 = vld [vmem:[%s1 + $0xd48] sm:$0xff]
    %v455 = vld [vmem:[%s1 + $0xd50] sm:$0xff]
    %v456 = vld [vmem:[%s1 + $0xd58] sm:$0xff]
    %v457 = vld [vmem:[%s1 + $0xd60] sm:$0xff]
    %v458 = vld [vmem:[%s1 + $0xd68] sm:$0xff]
    %v459 = vld [vmem:[%s1 + $0xd70] sm:$0xff]
    %v460 = vld [vmem:[%s1 + $0xd78] sm:$0xff]
    %v461 = vld [vmem:[%s1 + $0xd80] sm:$0xff]
    %v462 = vld [vmem:[%s1 + $0xd88] sm:$0xff]
    %v463 = vld [vmem:[%s1 + $0xd90] sm:$0xff]
    %v464 = vld [vmem:[%s1 + $0xd98] sm:$0xff]
    %v465 = vld [vmem:[%s1 + $0xda0] sm:$0xff]
    %v466 = vld [vmem:[%s1 + $0xda8] sm:$0xff]
    %v467 = vld [vmem:[%s1 + $0xdb0] sm:$0xff]
    %v468 = vld [vmem:[%s1 + $0xdb8] sm:$0xff]
    %v469 = vld [vmem:[%s1 + $0xdc0] sm:$0xff]
    %v470 = vld [vmem:[%s1 + $0xdc8] sm:$0xff]
    %v471 = vld [vmem:[%s1 + $0xdd0] sm:$0xff]
    %v472 = vld [vmem:[%s1 + $0xdd8] sm:$0xff]
    %v473 = vld [vmem:[%s1 + $0xde0] sm:$0xff]
    %v474 = vld [vmem:[%s1 + $0xde8] sm:$0xff]
    %v475 = vld [vmem:[%s1 + $0xdf0] sm:$0xff]
    %v476 = vld [vmem:[%s1 + $0xdf8] sm:$0xff]
    %v477 = vld [vmem:[%s1 + $0xe00] sm:$0xff]
    %v478 = vld [vmem:[%s1 + $0xe08] sm:$0xff]
    %v479 = vld [vmem:[%s1 + $0xe10] sm:$0xff]
    %v480 = vld [vmem:[%s1 + $0xe18] sm:$0xff]
    %v481 = vld [vmem:[%s1 + $0xe20] sm:$0xff]
    %v482 = vld [vmem:[%s1 + $0xe28] sm:$0xff]
    %v483 = vld [vmem:[%s1 + $0xe30] sm:$0xff]
    %v484 = vld [vmem:[%s1 + $0xe38] sm:$0xff]
    %v485 = vld [vmem:[%s1 + $0xe40] sm:$0xff]
    %v486 = vld [vmem:[%s1 + $0xe48] sm:$0xff]
    %v487 = vld [vmem:[%s1 + $0xe50] sm:$0xff]
    %v488 = vld [vmem:[%s1 + $0xe58] sm:$0xff]
    %v489 = vld [vmem:[%s1 + $0xe60] sm:$0xff]
    %v490 = vld [vmem:[%s1 + $0xe68] sm:$0xff]
    %v491 = vld [vmem:[%s1 + $0xe70] sm:$0xff]
    %v492 = vld [vmem:[%s1 + $0xe78] sm:$0xff]
    %v493 = vld [vmem:[%s1 + $0xe80] sm:$0xff]
    %v494 = vld [vmem:[%s1 + $0xe88] sm:$0xff]
    %v495 = vld [vmem:[%s1 + $0xe90] sm:$0xff]
    %v496 = vld [vmem:[%s1 + $0xe98] sm:$0xff]
    %v497 = vld [vmem:[%s1 + $0xea0] sm:$0xff]
    %v498 = vld [vmem:[%s1 + $0xea8] sm:$0xff]
    %v499 = vld [vmem:[%s1 + $0xeb0] sm:$0xff]
    %v500 = vld [vmem:[%s1 + $0xeb8] sm:$0xff]
    %v501 = vld [vmem:[%s1 + $0xec0] sm:$0xff]
    %v502 = vld [vmem:[%s1 + $0xec8] sm:$0xff]
    %v503 = vld [vmem:[%s1 + $0xed0] sm:$0xff]
    %v504 = vld [vmem:[%s1 + $0xed8] sm:$0xff]
    %v505 = vld [vmem:[%s1 + $0xee0] sm:$0xff]
    %v506 = vld [vmem:[%s1 + $0xee8] sm:$0xff]
    %v507 = vld [vmem:[%s1 + $0xef0] sm:$0xff]
    %v508 = vld [vmem:[%s1 + $0xef8] sm:$0xff]
    %v509 = vld [vmem:[%s1 + $0xf00] sm:$0xff]
    %v510 = vld [vmem:[%s1 + $0xf08] sm:$0xff]
    %v511 = vld [vmem:[%s1 + $0xf10] sm:$0xff]
    %v512 = vld [vmem:[%s1 + $0xf18] sm:$0xff]
    %v513 = vld [vmem:[%s1 + $0xf20] sm:$0xff]
    %v514 = vld [vmem:[%s1 + $0xf28] sm:$0xff]
    %v515 = vld [vmem:[%s1 + $0xf30] sm:$0xff]
    %v516 = vld [vmem:[%s1 + $0xf38] sm:$0xff]
    %v517 = vld [vmem:[%s1 + $0xf40] sm:$0xff]
    %v518 = vld [vmem:[%s1 + $0xf48] sm:$0xff]
    %v519 = vld [vmem:[%s1 + $0xf50] sm:$0xff]
    %v520 = vld [vmem:[%s1 + $0xf58] sm:$0xff]
    %v521 = vld [vmem:[%s1 + $0xf60] sm:$0xff]
    %v522 = vld [vmem:[%s1 + $0xf68] sm:$0xff]
    %v523 = vld [vmem:[%s1 + $0xf70] sm:$0xff]
    %v524 = vld [vmem:[%s1 + $0xf78] sm:$0xff]
    %v525 = vld [vmem:[%s1 + $0xf80] sm:$0xff]
    %v526 = vld [vmem:[%s1 + $0xf88] sm:$0xff]
    %v527 = vld [vmem:[%s1 + $0xf90] sm:$0xff]
    %v528 = vld [vmem:[%s1 + $0xf98] sm:$0xff]
    %v529 = vld [vmem:[%s1 + $0xfa0] sm:$0xff]
    %v530 = vld [vmem:[%s1 + $0xfa8] sm:$0xff]
    %v531 = vld [vmem:[%s1 + $0xfb0] sm:$0xff]
    %v532 = vld [vmem:[%s1 + $0xfb8] sm:$0xff]
    %v533 = vld [vmem:[%s1 + $0xfc0] sm:$0xff]
    %v534 = vld [vmem:[%s1 + $0xfc8] sm:$0xff]
    %v535 = vld [vmem:[%s1 + $0xfd0] sm:$0xff]
    %v536 = vld [vmem:[%s1 + $0xfd8] sm:$0xff]
    %v537 = vld [vmem:[%s1 + $0xfe0] sm:$0xff]
    %v538 = vld [vmem:[%s1 + $0xfe8] sm:$0xff]
    %v539 = vld [vmem:[%s1 + $0xff0] sm:$0xff]
    %v540 = vld [vmem:[%s1 + $0xff8] sm:$0xff]
    %v541 = vld [vmem:[%s1 + $0x1000] sm:$0xff]
    %v542 = vld [vmem:[%s1 + $0x1008] sm:$0xff]
    %v543 = vld [vmem:[%s1 + $0x1010] sm:$0xff]
    %v544 = vld [vmem:[%s1 + $0x1018] sm:$0xff]
    %v545 = vld [vmem:[%s1 + $0x1020] sm:$0xff]
    %v546 = vld [vmem:[%s1 + $0x1028] sm:$0xff]
    %v547 = vld [vmem:[%s1 + $0x1030] sm:$0xff]
    %v548 = vld [vmem:[%s1 + $0x1038] sm:$0xff]
    %v549 = vld [vmem:[%s1 + $0x1040] sm:$0xff]
    %v550 = vld [vmem:[%s1 + $0x1048] sm:$0xff]
    %v551 = vld [vmem:[%s1 + $0x1050] sm:$0xff]
    %v552 = vld [vmem:[%s1 + $0x1058] sm:$0xff]
    %v553 = vld [vmem:[%s1 + $0x1060] sm:$0xff]
    %v554 = vld [vmem:[%s1 + $0x1068] sm:$0xff]
    %v555 = vld [vmem:[%s1 + $0x1070] sm:$0xff]
    %v556 = vld [vmem:[%s1 + $0x1078] sm:$0xff]
    %v557 = vld [vmem:[%s1 + $0x1080] sm:$0xff]
    %v558 = vld [vmem:[%s1 + $0x1088] sm:$0xff]
    %v559 = vld [vmem:[%s1 + $0x1090] sm:$0xff]
    %v560 = vld [vmem:[%s1 + $0x1098] sm:$0xff]
    %v561 = vld [vmem:[%s1 + $0x10a0] sm:$0xff]
    %v562 = vld [vmem:[%s1 + $0x10a8] sm:$0xff]
    %v563 = vld [vmem:[%s1 + $0x10b0] sm:$0xff]
    %v564 = vld [vmem:[%s1 + $0x10b8] sm:$0xff]
    %v565 = vld [vmem:[%s1 + $0x10c0] sm:$0xff]
    %v566 = vld [vmem:[%s1 + $0x10c8] sm:$0xff]
    %v567 = vld [vmem:[%s1 + $0x10d0] sm:$0xff]
    %v568 = vld [vmem:[%s1 + $0x10d8] sm:$0xff]
    %v569 = vld [vmem:[%s1 + $0x10e0] sm:$0xff]
    %v570 = vld [vmem:[%s1 + $0x10e8] sm:$0xff]
    %v571 = vld [vmem:[%s1 + $0x10f0] sm:$0xff]
    %v572 = vld [vmem:[%s1 + $0x10f8] sm:$0xff]
    %v573 = vld [vmem:[%s1 + $0x1100] sm:$0xff]
    %v574 = vld [vmem:[%s1 + $0x1108] sm:$0xff]
    %v575 = vld [vmem:[%s1 + $0x1110] sm:$0xff]
    %v576 = vld [vmem:[%s1 + $0x1118] sm:$0xff]
    %v577 = vld [vmem:[%s1 + $0x1120] sm:$0xff]
    %v578 = vld [vmem:[%s1 + $0x1128] sm:$0xff]
    %v579 = vld [vmem:[%s1 + $0x1130] sm:$0xff]
    %v580 = vld [vmem:[%s1 + $0x1138] sm:$0xff]
    %v581 = vld [vmem:[%s1 + $0x1140] sm:$0xff]
    %v582 = vld [vmem:[%s1 + $0x1148] sm:$0xff]
    %v583 = vld [vmem:[%s1 + $0x1150] sm:$0xff]
    %v584 = vld [vmem:[%s1 + $0x1158] sm:$0xff]
    %v585 = vld [vmem:[%s1 + $0x1160] sm:$0xff]
    %v586 = vld [vmem:[%s1 + $0x1168] sm:$0xff]
    %v587 = vld [vmem:[%s1 + $0x1170] sm:$0xff]
    %v588 = vld [vmem:[%s1 + $0x1178] sm:$0xff]
    %v589 = vld [vmem:[%s1 + $0x1180] sm:$0xff]
    %v590 = vld [vmem:[%s1 + $0x1188] sm:$0xff]
    %v591 = vld [vmem:[%s1 + $0x1190] sm:$0xff]
    %v592 = vld [vmem:[%s1 + $0x1198] sm:$0xff]
    %v593 = vld [vmem:[%s1 + $0x11a0] sm:$0xff]
    %v594 = vld [vmem:[%s1 + $0x11a8] sm:$0xff]
    %v595 = vld [vmem:[%s1 + $0x11b0] sm:$0xff]
    %v596 = vld [vmem:[%s1 + $0x11b8] sm:$0xff]
    %v597 = vld [vmem:[%s1 + $0x11c0] sm:$0xff]
    %v598 = vld [vmem:[%s1 + $0x11c8] sm:$0xff]
    %v599 = vld [vmem:[%s1 + $0x11d0] sm:$0xff]
    %v600 = vld [vmem:[%s1 + $0x11d8] sm:$0xff]
    %v601 = vld [vmem:[%s1 + $0x11e0] sm:$0xff]
    %v602 = vld [vmem:[%s1 + $0x11e8] sm:$0xff]
    %v603 = vld [vmem:[%s1 + $0x11f0] sm:$0xff]
    %v604 = vld [vmem:[%s1 + $0x11f8] sm:$0xff]
    %v605 = vld [vmem:[%s1 + $0x1200] sm:$0xff]
    %v606 = vld [vmem:[%s1 + $0x1208] sm:$0xff]
    %v607 = vld [vmem:[%s1 + $0x1210] sm:$0xff]
    %v608 = vld [vmem:[%s1 + $0x1218] sm:$0xff]
    %v609 = vld [vmem:[%s1 + $0x1220] sm:$0xff]
    %v610 = vld [vmem:[%s1 + $0x1228] sm:$0xff]
    %v611 = vld [vmem:[%s1 + $0x1230] sm:$0xff]
    %v612 = vld [vmem:[%s1 + $0x1238] sm:$0xff]
    %v613 = vld [vmem:[%s1 + $0x1240] sm:$0xff]
    %v614 = vld [vmem:[%s1 + $0x1248] sm:$0xff]
    %v615 = vld [vmem:[%s1 + $0x1250] sm:$0xff]
    %v616 = vld [vmem:[%s1 + $0x1258] sm:$0xff]
    %v617 = vld [vmem:[%s1 + $0x1260] sm:$0xff]
    %v618 = vld [vmem:[%s1 + $0x1268] sm:$0xff]
    %v619 = vld [vmem:[%s1 + $0x1270] sm:$0xff]
    %v620 = vld [vmem:[%s1 + $0x1278] sm:$0xff]
    %v621 = vld [vmem:[%s1 + $0x1280] sm:$0xff]
    %v622 = vld [vmem:[%s1 + $0x1288] sm:$0xff]
    %v623 = vld [vmem:[%s1 + $0x1290] sm:$0xff]
    %v624 = vld [vmem:[%s1 + $0x1298] sm:$0xff]
    %v625 = vld [vmem:[%s1 + $0x12a0] sm:$0xff]
    %v626 = vld [vmem:[%s1 + $0x12a8] sm:$0xff]
    %v627 = vld [vmem:[%s1 + $0x12b0] sm:$0xff]
    %v628 = vld [vmem:[%s1 + $0x12b8] sm:$0xff]
    %v629 = vld [vmem:[%s1 + $0x12c0] sm:$0xff]
    %v630 = vld [vmem:[%s1 + $0x12c8] sm:$0xff]
    %v631 = vld [vmem:[%s1 + $0x12d0] sm:$0xff]
    %v632 = vld [vmem:[%s1 + $0x12d8] sm:$0xff]
    %v633 = vld [vmem:[%s1 + $0x12e0] sm:$0xff]
    %v634 = vld [vmem:[%s1 + $0x12e8] sm:$0xff]
    %v635 = vld [vmem:[%s1 + $0x12f0] sm:$0xff]
    %v636 = vld [vmem:[%s1 + $0x12f8] sm:$0xff]
    %v637 = vld [vmem:[%s1 + $0x1300] sm:$0xff]
    %v638 = vld [vmem:[%s1 + $0x1308] sm:$0xff]
    %v639 = vld [vmem:[%s1 + $0x1310] sm:$0xff]
    %v640 = vld [vmem:[%s1 + $0x1318] sm:$0xff]
    %v641 = vld [vmem:[%s1 + $0x1320] sm:$0xff]
    %v642 = vld [vmem:[%s1 + $0x1328] sm:$0xff]
    %v643 = vld [vmem:[%s1 + $0x1330] sm:$0xff]
    %v644 = vld [vmem:[%s1 + $0x1338] sm:$0xff]
    %v645 = vld [vmem:[%s1 + $0x1340] sm:$0xff]
    %v646 = vld [vmem:[%s1 + $0x1348] sm:$0xff]
    %v647 = vld [vmem:[%s1 + $0x1350] sm:$0xff]
    %v648 = vld [vmem:[%s1 + $0x1358] sm:$0xff]
    %v649 = vld [vmem:[%s1 + $0x1360] sm:$0xff]
    %v650 = vld [vmem:[%s1 + $0x1368] sm:$0xff]
    %v651 = vld [vmem:[%s1 + $0x1370] sm:$0xff]
    %v652 = vld [vmem:[%s1 + $0x1378] sm:$0xff]
    %v653 = vld [vmem:[%s1 + $0x1380] sm:$0xff]
    %v654 = vld [vmem:[%s1 + $0x1388] sm:$0xff]
    %v655 = vld [vmem:[%s1 + $0x1390] sm:$0xff]
    %v656 = vld [vmem:[%s1 + $0x1398] sm:$0xff]
    %v657 = vld [vmem:[%s1 + $0x13a0] sm:$0xff]
    %v658 = vld [vmem:[%s1 + $0x13a8] sm:$0xff]
    %v659 = vld [vmem:[%s1 + $0x13b0] sm:$0xff]
    %v660 = vld [vmem:[%s1 + $0x13b8] sm:$0xff]
    %v661 = vld [vmem:[%s1 + $0x13c0] sm:$0xff]
    %v662 = vld [vmem:[%s1 + $0x13c8] sm:$0xff]
    %v663 = vld [vmem:[%s1 + $0x13d0] sm:$0xff]
    %v664 = vld [vmem:[%s1 + $0x13d8] sm:$0xff]
    %v665 = vld [vmem:[%s1 + $0x13e0] sm:$0xff]
    %v666 = vld [vmem:[%s1 + $0x13e8] sm:$0xff]
    %v667 = vld [vmem:[%s1 + $0x13f0] sm:$0xff]
    %v668 = vld [vmem:[%s1 + $0x13f8] sm:$0xff]
    %v669 = vld [vmem:[%s1 + $0x1400] sm:$0xff]
    %v670 = vld [vmem:[%s1 + $0x1408] sm:$0xff]
    %v671 = vld [vmem:[%s1 + $0x1410] sm:$0xff]
    %v672 = vld [vmem:[%s1 + $0x1418] sm:$0xff]
    %v673 = vld [vmem:[%s1 + $0x1420] sm:$0xff]
    %v674 = vld [vmem:[%s1 + $0x1428] sm:$0xff]
    %v675 = vld [vmem:[%s1 + $0x1430] sm:$0xff]
    %v676 = vld [vmem:[%s1 + $0x1438] sm:$0xff]
    %v677 = vld [vmem:[%s1 + $0x1440] sm:$0xff]
    %v678 = vld [vmem:[%s1 + $0x1448] sm:$0xff]
    %v679 = vld [vmem:[%s1 + $0x1450] sm:$0xff]
    %v680 = vld [vmem:[%s1 + $0x1458] sm:$0xff]
    %v681 = vld [vmem:[%s1 + $0x1460] sm:$0xff]
    %v682 = vld [vmem:[%s1 + $0x1468] sm:$0xff]
    %v683 = vld [vmem:[%s1 + $0x1470] sm:$0xff]
    %v684 = vld [vmem:[%s1 + $0x1478] sm:$0xff]
    %v685 = vld [vmem:[%s1 + $0x1480] sm:$0xff]
    %v686 = vld [vmem:[%s1 + $0x1488] sm:$0xff]
    %v687 = vld [vmem:[%s1 + $0x1490] sm:$0xff]
    %v688 = vld [vmem:[%s1 + $0x1498] sm:$0xff]
    %v689 = vld [vmem:[%s1 + $0x14a0] sm:$0xff]
    %v690 = vld [vmem:[%s1 + $0x14a8] sm:$0xff]
    %v691 = vld [vmem:[%s1 + $0x14b0] sm:$0xff]
    %v692 = vld [vmem:[%s1 + $0x14b8] sm:$0xff]
    %v693 = vld [vmem:[%s1 + $0x14c0] sm:$0xff]
    %v694 = vld [vmem:[%s1 + $0x14c8] sm:$0xff]
    %v695 = vld [vmem:[%s1 + $0x14d0] sm:$0xff]
    %v696 = vld [vmem:[%s1 + $0x14d8] sm:$0xff]
    %v697 = vld [vmem:[%s1 + $0x14e0] sm:$0xff]
    %v698 = vld [vmem:[%s1 + $0x14e8] sm:$0xff]
    %v699 = vld [vmem:[%s1 + $0x14f0] sm:$0xff]
    %v700 = vld [vmem:[%s1 + $0x14f8] sm:$0xff]
    %v701 = vld [vmem:[%s1 + $0x1500] sm:$0xff]
    %v702 = vld [vmem:[%s1 + $0x1508] sm:$0xff]
    %v703 = vld [vmem:[%s1 + $0x1510] sm:$0xff]
    %v704 = vld [vmem:[%s1 + $0x1518] sm:$0xff]
    %v705 = vld [vmem:[%s1 + $0x1520] sm:$0xff]
    %v706 = vld [vmem:[%s1 + $0x1528] sm:$0xff]
    %v707 = vld [vmem:[%s1 + $0x1530] sm:$0xff]
    %v708 = vld [vmem:[%s1 + $0x1538] sm:$0xff]
    %v709 = vld [vmem:[%s1 + $0x1540] sm:$0xff]
    %v710 = vld [vmem:[%s1 + $0x1548] sm:$0xff]
    %v711 = vld [vmem:[%s1 + $0x1550] sm:$0xff]
    %v712 = vld [vmem:[%s1 + $0x1558] sm:$0xff]
    %v713 = vld [vmem:[%s1 + $0x1560] sm:$0xff]
    %v714 = vld [vmem:[%s1 + $0x1568] sm:$0xff]
    %v715 = vld [vmem:[%s1 + $0x1570] sm:$0xff]
    %v716 = vld [vmem:[%s1 + $0x1578] sm:$0xff]
    %v717 = vld [vmem:[%s1 + $0x1580] sm:$0xff]
    %v718 = vld [vmem:[%s1 + $0x1588] sm:$0xff]
    %v719 = vld [vmem:[%s1 + $0x1590] sm:$0xff]
    %v720 = vld [vmem:[%s1 + $0x1598] sm:$0xff]
    %v721 = vld [vmem:[%s1 + $0x15a0] sm:$0xff]
    %v722 = vld [vmem:[%s1 + $0x15a8] sm:$0xff]
    %v723 = vld [vmem:[%s1 + $0x15b0] sm:$0xff]
    %v724 = vld [vmem:[%s1 + $0x15b8] sm:$0xff]
    %v725 = vld [vmem:[%s1 + $0x15c0] sm:$0xff]
    %v726 = vld [vmem:[%s1 + $0x15c8] sm:$0xff]
    %v727 = vld [vmem:[%s1 + $0x15d0] sm:$0xff]
    %v728 = vld [vmem:[%s1 + $0x15d8] sm:$0xff]
    %v729 = vld [vmem:[%s1 + $0x15e0] sm:$0xff]
    %v730 = vld [vmem:[%s1 + $0x15e8] sm:$0xff]
    %v731 = vld [vmem:[%s1 + $0x15f0] sm:$0xff]
    %v732 = vld [vmem:[%s1 + $0x15f8] sm:$0xff]
    %v733 = vld [vmem:[%s1 + $0x1600] sm:$0xff]
    %v734 = vld [vmem:[%s1 + $0x1608] sm:$0xff]
    %v735 = vld [vmem:[%s1 + $0x1610] sm:$0xff]
    %v736 = vld [vmem:[%s1 + $0x1618] sm:$0xff]
    %v737 = vld [vmem:[%s1 + $0x1620] sm:$0xff]
    %v738 = vld [vmem:[%s1 + $0x1628] sm:$0xff]
    %v739 = vld [vmem:[%s1 + $0x1630] sm:$0xff]
    %v740 = vld [vmem:[%s1 + $0x1638] sm:$0xff]
    %v741 = vld [vmem:[%s1 + $0x1640] sm:$0xff]
    %v742 = vld [vmem:[%s1 + $0x1648] sm:$0xff]
    %v743 = vld [vmem:[%s1 + $0x1650] sm:$0xff]
    %v744 = vld [vmem:[%s1 + $0x1658] sm:$0xff]
    %v745 = vld [vmem:[%s1 + $0x1660] sm:$0xff]
    %v746 = vld [vmem:[%s1 + $0x1668] sm:$0xff]
    %v747 = vld [vmem:[%s1 + $0x1670] sm:$0xff]
    %v748 = vld [vmem:[%s1 + $0x1678] sm:$0xff]
    %v749 = vld [vmem:[%s1 + $0x1680] sm:$0xff]
    %v750 = vld [vmem:[%s1 + $0x1688] sm:$0xff]
    %v751 = vld [vmem:[%s1 + $0x1690] sm:$0xff]
    %v752 = vld [vmem:[%s1 + $0x1698] sm:$0xff]
    %v753 = vld [vmem:[%s1 + $0x16a0] sm:$0xff]
    %v754 = vld [vmem:[%s1 + $0x16a8] sm:$0xff]
    %v755 = vld [vmem:[%s1 + $0x16b0] sm:$0xff]
    %v756 = vld [vmem:[%s1 + $0x16b8] sm:$0xff]
    %v757 = vld [vmem:[%s1 + $0x16c0] sm:$0xff]
    %v758 = vld [vmem:[%s1 + $0x16c8] sm:$0xff]
    %v759 = vld [vmem:[%s1 + $0x16d0] sm:$0xff]
    %v760 = vld [vmem:[%s1 + $0x16d8] sm:$0xff]
    %v761 = vld [vmem:[%s1 + $0x16e0] sm:$0xff]
    %v762 = vld [vmem:[%s1 + $0x16e8] sm:$0xff]
    %v763 = vld [vmem:[%s1 + $0x16f0] sm:$0xff]
    %v764 = vld [vmem:[%s1 + $0x16f8] sm:$0xff]
    %v765 = vld [vmem:[%s1 + $0x1700] sm:$0xff]
    %v766 = vld [vmem:[%s1 + $0x1708] sm:$0xff]
    %v767 = vld [vmem:[%s1 + $0x1710] sm:$0xff]
    %v768 = vld [vmem:[%s1 + $0x1718] sm:$0xff]
    %v769 = vld [vmem:[%s1 + $0x1720] sm:$0xff]
    %v770 = vld [vmem:[%s1 + $0x1728] sm:$0xff]
    %v771 = vld [vmem:[%s1 + $0x1730] sm:$0xff]
    %v772 = vld [vmem:[%s1 + $0x1738] sm:$0xff]
    %v773 = vld [vmem:[%s1 + $0x1740] sm:$0xff]
    %v774 = vld [vmem:[%s1 + $0x1748] sm:$0xff]
    %v775 = vld [vmem:[%s1 + $0x1750] sm:$0xff]
    %v776 = vld [vmem:[%s1 + $0x1758] sm:$0xff]
    %v777 = vld [vmem:[%s1 + $0x1760] sm:$0xff]
    %v778 = vld [vmem:[%s1 + $0x1768] sm:$0xff]
    %v779 = vld [vmem:[%s1 + $0x1770] sm:$0xff]
    %v780 = vld [vmem:[%s1 + $0x1778] sm:$0xff]
    %v781 = vld [vmem:[%s1 + $0x1780] sm:$0xff]
    %v782 = vld [vmem:[%s1 + $0x1788] sm:$0xff]
    %v783 = vld [vmem:[%s1 + $0x1790] sm:$0xff]
    %v784 = vld [vmem:[%s1 + $0x1798] sm:$0xff]
    %v785 = vld [vmem:[%s1 + $0x17a0] sm:$0xff]
    %v786 = vld [vmem:[%s1 + $0x17a8] sm:$0xff]
    %v787 = vld [vmem:[%s1 + $0x17b0] sm:$0xff]
    %v788 = vld [vmem:[%s1 + $0x17b8] sm:$0xff]
    %v789 = vld [vmem:[%s1 + $0x17c0] sm:$0xff]
    %v790 = vld [vmem:[%s1 + $0x17c8] sm:$0xff]
    %v791 = vld [vmem:[%s1 + $0x17d0] sm:$0xff]
    %v792 = vld [vmem:[%s1 + $0x17d8] sm:$0xff]
    %v793 = vld [vmem:[%s1 + $0x17e0] sm:$0xff]
    %v794 = vld [vmem:[%s1 + $0x17e8] sm:$0xff]
    %v795 = vld [vmem:[%s1 + $0x17f0] sm:$0xff]
    %v796 = vld [vmem:[%s1 + $0x17f8] sm:$0xff]
    %v797 = vld [vmem:[%s1 + $0x1800] sm:$0xff]
    %v798 = vld [vmem:[%s1 + $0x1808] sm:$0xff]
    %v799 = vld [vmem:[%s1 + $0x1810] sm:$0xff]
    %v800 = vld [vmem:[%s1 + $0x1818] sm:$0xff]
    %v801 = vld [vmem:[%s1 + $0x1820] sm:$0xff]
    %v802 = vld [vmem:[%s1 + $0x1828] sm:$0xff]
    %v803 = vld [vmem:[%s1 + $0x1830] sm:$0xff]
    %v804 = vld [vmem:[%s1 + $0x1838] sm:$0xff]
    %v805 = vld [vmem:[%s1 + $0x1840] sm:$0xff]
    %v806 = vld [vmem:[%s1 + $0x1848] sm:$0xff]
    %v807 = vld [vmem:[%s1 + $0x1850] sm:$0xff]
    %v808 = vld [vmem:[%s1 + $0x1858] sm:$0xff]
    %v809 = vld [vmem:[%s1 + $0x1860] sm:$0xff]
    %v810 = vld [vmem:[%s1 + $0x1868] sm:$0xff]
    %v811 = vld [vmem:[%s1 + $0x1870] sm:$0xff]
    %v812 = vld [vmem:[%s1 + $0x1878] sm:$0xff]
    %v813 = vld [vmem:[%s1 + $0x1880] sm:$0xff]
    %v814 = vld [vmem:[%s1 + $0x1888] sm:$0xff]
    %v815 = vld [vmem:[%s1 + $0x1890] sm:$0xff]
    %v816 = vld [vmem:[%s1 + $0x1898] sm:$0xff]
    %v817 = vld [vmem:[%s1 + $0x18a0] sm:$0xff]
    %v818 = vld [vmem:[%s1 + $0x18a8] sm:$0xff]
    %v819 = vld [vmem:[%s1 + $0x18b0] sm:$0xff]
    %v820 = vld [vmem:[%s1 + $0x18b8] sm:$0xff]
    %v821 = vld [vmem:[%s1 + $0x18c0] sm:$0xff]
    %v822 = vld [vmem:[%s1 + $0x18c8] sm:$0xff]
    %v823 = vld [vmem:[%s1 + $0x18d0] sm:$0xff]
    %v824 = vld [vmem:[%s1 + $0x18d8] sm:$0xff]
    %v825 = vld [vmem:[%s1 + $0x18e0] sm:$0xff]
    %v826 = vld [vmem:[%s1 + $0x18e8] sm:$0xff]
    %v827 = vld [vmem:[%s1 + $0x18f0] sm:$0xff]
    %v828 = vld [vmem:[%s1 + $0x18f8] sm:$0xff]
    %v829 = vld [vmem:[%s1 + $0x1900] sm:$0xff]
    %v830 = vld [vmem:[%s1 + $0x1908] sm:$0xff]
    %v831 = vld [vmem:[%s1 + $0x1910] sm:$0xff]
    %v832 = vld [vmem:[%s1 + $0x1918] sm:$0xff]
    %v833 = vld [vmem:[%s1 + $0x1920] sm:$0xff]
    %v834 = vld [vmem:[%s1 + $0x1928] sm:$0xff]
    %v835 = vld [vmem:[%s1 + $0x1930] sm:$0xff]
    %v836 = vld [vmem:[%s1 + $0x1938] sm:$0xff]
    %v837 = vld [vmem:[%s1 + $0x1940] sm:$0xff]
    %v838 = vld [vmem:[%s1 + $0x1948] sm:$0xff]
    %v839 = vld [vmem:[%s1 + $0x1950] sm:$0xff]
    %v840 = vld [vmem:[%s1 + $0x1958] sm:$0xff]
    %v841 = vld [vmem:[%s1 + $0x1960] sm:$0xff]
    %v842 = vld [vmem:[%s1 + $0x1968] sm:$0xff]
    %v843 = vld [vmem:[%s1 + $0x1970] sm:$0xff]
    %v844 = vld [vmem:[%s1 + $0x1978] sm:$0xff]
    %v845 = vld [vmem:[%s1 + $0x1980] sm:$0xff]
    %v846 = vld [vmem:[%s1 + $0x1988] sm:$0xff]
    %v847 = vld [vmem:[%s1 + $0x1990] sm:$0xff]
    %v848 = vld [vmem:[%s1 + $0x1998] sm:$0xff]
    %v849 = vld [vmem:[%s1 + $0x19a0] sm:$0xff]
    %v850 = vld [vmem:[%s1 + $0x19a8] sm:$0xff]
    %v851 = vld [vmem:[%s1 + $0x19b0] sm:$0xff]
    %v852 = vld [vmem:[%s1 + $0x19b8] sm:$0xff]
    %v853 = vld [vmem:[%s1 + $0x19c0] sm:$0xff]
    %v854 = vld [vmem:[%s1 + $0x19c8] sm:$0xff]
    %v855 = vld [vmem:[%s1 + $0x19d0] sm:$0xff]
    %v856 = vld [vmem:[%s1 + $0x19d8] sm:$0xff]
    %v857 = vld [vmem:[%s1 + $0x19e0] sm:$0xff]
    %v858 = vld [vmem:[%s1 + $0x19e8] sm:$0xff]
    %v859 = vld [vmem:[%s1 + $0x19f0] sm:$0xff]
    %v860 = vld [vmem:[%s1 + $0x19f8] sm:$0xff]
    %v861 = vld [vmem:[%s1 + $0x1a00] sm:$0xff]
    %v862 = vld [vmem:[%s1 + $0x1a08] sm:$0xff]
    %v863 = vld [vmem:[%s1 + $0x1a10] sm:$0xff]
    %v864 = vld [vmem:[%s1 + $0x1a18] sm:$0xff]
    %v865 = vld [vmem:[%s1 + $0x1a20] sm:$0xff]
    %v866 = vld [vmem:[%s1 + $0x1a28] sm:$0xff]
    %v867 = vld [vmem:[%s1 + $0x1a30] sm:$0xff]
    %v868 = vld [vmem:[%s1 + $0x1a38] sm:$0xff]
    %v869 = vld [vmem:[%s1 + $0x1a40] sm:$0xff]
    %v870 = vld [vmem:[%s1 + $0x1a48] sm:$0xff]
    %v871 = vld [vmem:[%s1 + $0x1a50] sm:$0xff]
    %v872 = vld [vmem:[%s1 + $0x1a58] sm:$0xff]
    %v873 = vld [vmem:[%s1 + $0x1a60] sm:$0xff]
    %v874 = vld [vmem:[%s1 + $0x1a68] sm:$0xff]
    %v875 = vld [vmem:[%s1 + $0x1a70] sm:$0xff]
    %v876 = vld [vmem:[%s1 + $0x1a78] sm:$0xff]
    %v877 = vld [vmem:[%s1 + $0x1a80] sm:$0xff]
    %v878 = vld [vmem:[%s1 + $0x1a88] sm:$0xff]
    %v879 = vld [vmem:[%s1 + $0x1a90] sm:$0xff]
    %v880 = vld [vmem:[%s1 + $0x1a98] sm:$0xff]
    %v881 = vld [vmem:[%s1 + $0x1aa0] sm:$0xff]
    %v882 = vld [vmem:[%s1 + $0x1aa8] sm:$0xff]
    %v883 = vld [vmem:[%s1 + $0x1ab0] sm:$0xff]
    %v884 = vld [vmem:[%s1 + $0x1ab8] sm:$0xff]
    %v885 = vld [vmem:[%s1 + $0x1ac0] sm:$0xff]
    %v886 = vld [vmem:[%s1 + $0x1ac8] sm:$0xff]
    %v887 = vld [vmem:[%s1 + $0x1ad0] sm:$0xff]
    %v888 = vld [vmem:[%s1 + $0x1ad8] sm:$0xff]
    %v889 = vld [vmem:[%s1 + $0x1ae0] sm:$0xff]
    %v890 = vld [vmem:[%s1 + $0x1ae8] sm:$0xff]
    %v891 = vld [vmem:[%s1 + $0x1af0] sm:$0xff]
    %v892 = vld [vmem:[%s1 + $0x1af8] sm:$0xff]
    %v893 = vld [vmem:[%s1 + $0x1b00] sm:$0xff]
    %v894 = vld [vmem:[%s1 + $0x1b08] sm:$0xff]
    %v895 = vld [vmem:[%s1 + $0x1b10] sm:$0xff]
    %v896 = vld [vmem:[%s1 + $0x1b18] sm:$0xff]
    %v897 = vld [vmem:[%s1 + $0x1b20] sm:$0xff]
    %v898 = vld [vmem:[%s1 + $0x1b28] sm:$0xff]
    %v899 = vld [vmem:[%s1 + $0x1b30] sm:$0xff]
    %v900 = vld [vmem:[%s1 + $0x1b38] sm:$0xff]
    %v901 = vld [vmem:[%s1 + $0x1b40] sm:$0xff]
    %v902 = vld [vmem:[%s1 + $0x1b48] sm:$0xff]
    %v903 = vld [vmem:[%s1 + $0x1b50] sm:$0xff]
    %v904 = vld [vmem:[%s1 + $0x1b58] sm:$0xff]
    %v905 = vld [vmem:[%s1 + $0x1b60] sm:$0xff]
    %v906 = vld [vmem:[%s1 + $0x1b68] sm:$0xff]
    %v907 = vld [vmem:[%s1 + $0x1b70] sm:$0xff]
    %v908 = vld [vmem:[%s1 + $0x1b78] sm:$0xff]
    %v909 = vld [vmem:[%s1 + $0x1b80] sm:$0xff]
    %v910 = vld [vmem:[%s1 + $0x1b88] sm:$0xff]
    %v911 = vld [vmem:[%s1 + $0x1b90] sm:$0xff]
    %v912 = vld [vmem:[%s1 + $0x1b98] sm:$0xff]
    %v913 = vld [vmem:[%s1 + $0x1ba0] sm:$0xff]
    %v914 = vld [vmem:[%s1 + $0x1ba8] sm:$0xff]
    %v915 = vld [vmem:[%s1 + $0x1bb0] sm:$0xff]
    %v916 = vld [vmem:[%s1 + $0x1bb8] sm:$0xff]
    %v917 = vld [vmem:[%s1 + $0x1bc0] sm:$0xff]
    %v918 = vld [vmem:[%s1 + $0x1bc8] sm:$0xff]
    %v919 = vld [vmem:[%s1 + $0x1bd0] sm:$0xff]
    %v920 = vld [vmem:[%s1 + $0x1bd8] sm:$0xff]
    %v921 = vld [vmem:[%s1 + $0x1be0] sm:$0xff]
    %v922 = vld [vmem:[%s1 + $0x1be8] sm:$0xff]
    %v923 = vld [vmem:[%s1 + $0x1bf0] sm:$0xff]
    %v924 = vld [vmem:[%s1 + $0x1bf8] sm:$0xff]
    %v925 = vld [vmem:[%s2] sm:$0x1]
    %v927 = vperm.slane %v925, 0
    %943 = vst [vmem:[#allocation1] ss:$4 sm:$0xff] %v15
    %s944 = scalar_lea.vmem [#allocation1], 32
    %945 = vst [vmem:[%s944] ss:$4 sm:$0xff] %v16
    %v946 = vld.sshfl [vmem:[#allocation1] sm:$0xff pattern:$0x73625140]
    %v947 = vld.sshfl [vmem:[#allocation1 + $0x8] sm:$0xff pattern:$0x73625140]
    %v948 = vld.sshfl [vmem:[#allocation1 + $0x10] sm:$0xff pattern:$0x73625140]
    %v949 = vld.sshfl [vmem:[#allocation1 + $0x18] sm:$0xff pattern:$0x73625140]
    %v950 = vld.sshfl [vmem:[#allocation1 + $0x20] sm:$0xff pattern:$0x73625140]
    %v951 = vld.sshfl [vmem:[#allocation1 + $0x28] sm:$0xff pattern:$0x73625140]
    %v952 = vld.sshfl [vmem:[#allocation1 + $0x30] sm:$0xff pattern:$0x73625140]
    %v953 = vld.sshfl [vmem:[#allocation1 + $0x38] sm:$0xff pattern:$0x73625140]
    %954 = vst [vmem:[#allocation1] ss:$4 sm:$0xff] %v17
    %955 = vst [vmem:[%s944] ss:$4 sm:$0xff] %v18
    %v956 = vld.sshfl [vmem:[#allocation1] sm:$0xff pattern:$0x73625140]
    %v957 = vld.sshfl [vmem:[#allocation1 + $0x8] sm:$0xff pattern:$0x73625140]
    %v958 = vld.sshfl [vmem:[#allocation1 + $0x10] sm:$0xff pattern:$0x73625140]
    %v959 = vld.sshfl [vmem:[#allocation1 + $0x18] sm:$0xff pattern:$0x73625140]
    %v960 = vld.sshfl [vmem:[#allocation1 + $0x20] sm:$0xff pattern:$0x73625140]
    %v961 = vld.sshfl [vmem:[#allocation1 + $0x28] sm:$0xff pattern:$0x73625140]
    %v962 = vld.sshfl [vmem:[#allocation1 + $0x30] sm:$0xff pattern:$0x73625140]
    %v963 = vld.sshfl [vmem:[#allocation1 + $0x38] sm:$0xff pattern:$0x73625140]
    %964 = vst [vmem:[#allocation1] ss:$4 sm:$0xff] %v19
    %965 = vst [vmem:[%s944] ss:$4 sm:$0xff] %v20
    %v966 = vld.sshfl [vmem:[#allocation1] sm:$0xff pattern:$0x73625140]
    %v967 = vld.sshfl [vmem:[#allocation1 + $0x8] sm:$0xff pattern:$0x73625140]
    %v968 = vld.sshfl [vmem:[#allocation1 + $0x10] sm:$0xff pattern:$0x73625140]
    %v969 = vld.sshfl [vmem:[#allocation1 + $0x18] sm:$0xff pattern:$0x73625140]
    %v970 = vld.sshfl [vmem:[#allocation1 + $0x20] sm:$0xff pattern:$0x73625140]
    %v971 = vld.sshfl [vmem:[#allocation1 + $0x28] sm:$0xff pattern:$0x73625140]
    %v972 = vld.sshfl [vmem:[#allocation1 + $0x30] sm:$0xff pattern:$0x73625140]
    %v973 = vld.sshfl [vmem:[#allocation1 + $0x38] sm:$0xff pattern:$0x73625140]
    %974 = vst [vmem:[#allocation1] ss:$4 sm:$0xff] %v21
    %975 = vst [vmem:[%s944] ss:$4 sm:$0xff] %v22
    %v976 = vld.sshfl [vmem:[#allocation1] sm:$0xff pattern:$0x73625140]
    %v977 = vld.sshfl [vmem:[#allocation1 + $0x8] sm:$0xff pattern:$0x73625140]
    %v978 = vld.sshfl [vmem:[#allocation1 + $0x10] sm:$0xff pattern:$0x73625140]
    %v979 = vld.sshfl [vmem:[#allocation1 + $0x18] sm:$0xff pattern:$0x73625140]
    %v980 = vld.sshfl [vmem:[#allocation1 + $0x20] sm:$0xff pattern:$0x73625140]
    %v981 = vld.sshfl [vmem:[#allocation1 + $0x28] sm:$0xff pattern:$0x73625140]
    %v982 = vld.sshfl [vmem:[#allocation1 + $0x30] sm:$0xff pattern:$0x73625140]
    %v983 = vld.sshfl [vmem:[#allocation1 + $0x38] sm:$0xff pattern:$0x73625140]
    %984 = vst [vmem:[#allocation1] ss:$4 sm:$0xff] %v23
    %985 = vst [vmem:[%s944] ss:$4 sm:$0xff] %v24
    %v986 = vld.sshfl [vmem:[#allocation1] sm:$0xff pattern:$0x73625140]
    %v987 = vld.sshfl [vmem:[#allocation1 + $0x8] sm:$0xff pattern:$0x73625140]
    %v988 = vld.sshfl [vmem:[#allocation1 + $0x10] sm:$0xff pattern:$0x73625140]
    %v989 = vld.sshfl [vmem:[#allocation1 + $0x18] sm:$0xff pattern:$0x73625140]
    %v990 = vld.sshfl [vmem:[#allocation1 + $0x20] sm:$0xff pattern:$0x73625140]
    %v991 = vld.sshfl [vmem:[#allocation1 + $0x28] sm:$0xff pattern:$0x73625140]
    %v992 = vld.sshfl [vmem:[#allocation1 + $0x30] sm:$0xff pattern:$0x73625140]
    %v993 = vld.sshfl [vmem:[#allocation1 + $0x38] sm:$0xff pattern:$0x73625140]
    %994 = vst [vmem:[#allocation1] ss:$4 sm:$0xff] %v25
    %995 = vst [vmem:[%s944] ss:$4 sm:$0xff] %v26
    %v996 = vld.sshfl [vmem:[#allocation1] sm:$0xff pattern:$0x73625140]
    %v997 = vld.sshfl [vmem:[#allocation1 + $0x8] sm:$0xff pattern:$0x73625140]
    %v998 = vld.sshfl [vmem:[#allocation1 + $0x10] sm:$0xff pattern:$0x73625140]
    %v999 = vld.sshfl [vmem:[#allocation1 + $0x18] sm:$0xff pattern:$0x73625140]
    %v1000 = vld.sshfl [vmem:[#allocation1 + $0x20] sm:$0xff pattern:$0x73625140]
    %v1001 = vld.sshfl [vmem:[#allocation1 + $0x28] sm:$0xff pattern:$0x73625140]
    %v1002 = vld.sshfl [vmem:[#allocation1 + $0x30] sm:$0xff pattern:$0x73625140]
    %v1003 = vld.sshfl [vmem:[#allocation1 + $0x38] sm:$0xff pattern:$0x73625140]
    %1004 = vst [vmem:[#allocation1] ss:$4 sm:$0xff] %v27
    %1005 = vst [vmem:[%s944] ss:$4 sm:$0xff] %v28
    %v1006 = vld.sshfl [vmem:[#allocation1] sm:$0xff pattern:$0x73625140]
    %v1007 = vld.sshfl [vmem:[#allocation1 + $0x8] sm:$0xff pattern:$0x73625140]
    %v1008 = vld.sshfl [vmem:[#allocation1 + $0x10] sm:$0xff pattern:$0x73625140]
    %v1009 = vld.sshfl [vmem:[#allocation1 + $0x18] sm:$0xff pattern:$0x73625140]
    %v1010 = vld.sshfl [vmem:[#allocation1 + $0x20] sm:$0xff pattern:$0x73625140]
    %v1011 = vld.sshfl [vmem:[#allocation1 + $0x28] sm:$0xff pattern:$0x73625140]
    %v1012 = vld.sshfl [vmem:[#allocation1 + $0x30] sm:$0xff pattern:$0x73625140]
    %v1013 = vld.sshfl [vmem:[#allocation1 + $0x38] sm:$0xff pattern:$0x73625140]
    %1070 = vmatpush.msra.mxu0 %v44
    %1071 = vmatpush.msra.mxu0 %v43
    %1072 = vmatpush.msra.mxu0 %v42
    %1073 = vmatpush.msra.mxu0 %v41
    %1074 = vmatpush.msra.mxu0 %v40
    %1075 = vmatpush.msra.mxu0 %v39
    %1076 = vmatpush.msra.mxu0 %v38
    %1077 = vmatpush.msra.mxu0 %v37
    %1078 = vmatpush.msra.mxu0 %v36
    %1079 = vmatpush.msra.mxu0 %v35
    %1080 = vmatpush.msra.mxu0 %v34
    %1081 = vmatpush.msra.mxu0 %v33
    %1082 = vmatpush.msra.mxu0 %v32
    %1083 = vmatpush.msra.mxu0 %v31
    %1084 = vmatpush.msra.mxu0 %v30
    %1085 = vmatpush.msra.mxu0 %v29
    %1086 = vmatmul.f32.gmra.mxu0 %v946
    %v1087 = vpop.f32.mrf.mxu0
    %v1088 = vadd.f32 %v927, %v1087
    %1089 = vdwg.mxu0
    %1090 = vmatpush.msra.mxu0 %v60
    %1091 = vmatpush.msra.mxu0 %v59
    %1092 = vmatpush.msra.mxu0 %v58
    %1093 = vmatpush.msra.mxu0 %v57
    %1094 = vmatpush.msra.mxu0 %v56
    %1095 = vmatpush.msra.mxu0 %v55
    %1096 = vmatpush.msra.mxu0 %v54
    %1097 = vmatpush.msra.mxu0 %v53
    %1098 = vmatpush.msra.mxu0 %v52
    %1099 = vmatpush.msra.mxu0 %v51
    %1100 = vmatpush.msra.mxu0 %v50
    %1101 = vmatpush.msra.mxu0 %v49
    %1102 = vmatpush.msra.mxu0 %v48
    %1103 = vmatpush.msra.mxu0 %v47
    %1104 = vmatpush.msra.mxu0 %v46
    %1105 = vmatpush.msra.mxu0 %v45
    %1106 = vmatmul.f32.gmra.mxu0 %v947
    %v1107 = vpop.f32.mrf.mxu0
    %v1108 = vadd.f32 %v1088, %v1107
    %1109 = vdwg.mxu0
    %1110 = vmatpush.msra.mxu0 %v76
    %1111 = vmatpush.msra.mxu0 %v75
    %1112 = vmatpush.msra.mxu0 %v74
    %1113 = vmatpush.msra.mxu0 %v73
    %1114 = vmatpush.msra.mxu0 %v72
    %1115 = vmatpush.msra.mxu0 %v71
    %1116 = vmatpush.msra.mxu0 %v70
    %1117 = vmatpush.msra.mxu0 %v69
    %1118 = vmatpush.msra.mxu0 %v68
    %1119 = vmatpush.msra.mxu0 %v67
    %1120 = vmatpush.msra.mxu0 %v66
    %1121 = vmatpush.msra.mxu0 %v65
    %1122 = vmatpush.msra.mxu0 %v64
    %1123 = vmatpush.msra.mxu0 %v63
    %1124 = vmatpush.msra.mxu0 %v62
    %1125 = vmatpush.msra.mxu0 %v61
    %1126 = vmatmul.f32.gmra.mxu0 %v948
    %v1127 = vpop.f32.mrf.mxu0
    %v1128 = vadd.f32 %v1108, %v1127
    %1129 = vdwg.mxu0
    %1130 = vmatpush.msra.mxu0 %v92
    %1131 = vmatpush.msra.mxu0 %v91
    %1132 = vmatpush.msra.mxu0 %v90
    %1133 = vmatpush.msra.mxu0 %v89
    %1134 = vmatpush.msra.mxu0 %v88
    %1135 = vmatpush.msra.mxu0 %v87
    %1136 = vmatpush.msra.mxu0 %v86
    %1137 = vmatpush.msra.mxu0 %v85
    %1138 = vmatpush.msra.mxu0 %v84
    %1139 = vmatpush.msra.mxu0 %v83
    %1140 = vmatpush.msra.mxu0 %v82
    %1141 = vmatpush.msra.mxu0 %v81
    %1142 = vmatpush.msra.mxu0 %v80
    %1143 = vmatpush.msra.mxu0 %v79
    %1144 = vmatpush.msra.mxu0 %v78
    %1145 = vmatpush.msra.mxu0 %v77
    %1146 = vmatmul.f32.gmra.mxu0 %v949
    %v1147 = vpop.f32.mrf.mxu0
    %v1148 = vadd.f32 %v1128, %v1147
    %1149 = vdwg.mxu0
    %1150 = vmatpush.msra.mxu0 %v108
    %1151 = vmatpush.msra.mxu0 %v107
    %1152 = vmatpush.msra.mxu0 %v106
    %1153 = vmatpush.msra.mxu0 %v105
    %1154 = vmatpush.msra.mxu0 %v104
    %1155 = vmatpush.msra.mxu0 %v103
    %1156 = vmatpush.msra.mxu0 %v102
    %1157 = vmatpush.msra.mxu0 %v101
    %1158 = vmatpush.msra.mxu0 %v100
    %1159 = vmatpush.msra.mxu0 %v99
    %1160 = vmatpush.msra.mxu0 %v98
    %1161 = vmatpush.msra.mxu0 %v97
    %1162 = vmatpush.msra.mxu0 %v96
    %1163 = vmatpush.msra.mxu0 %v95
    %1164 = vmatpush.msra.mxu0 %v94
    %1165 = vmatpush.msra.mxu0 %v93
    %1166 = vmatmul.f32.gmra.mxu0 %v950
    %v1167 = vpop.f32.mrf.mxu0
    %v1168 = vadd.f32 %v1148, %v1167
    %1169 = vdwg.mxu0
    %1170 = vmatpush.msra.mxu0 %v124
    %1171 = vmatpush.msra.mxu0 %v123
    %1172 = vmatpush.msra.mxu0 %v122
    %1173 = vmatpush.msra.mxu0 %v121
    %1174 = vmatpush.msra.mxu0 %v120
    %1175 = vmatpush.msra.mxu0 %v119
    %1176 = vmatpush.msra.mxu0 %v118
    %1177 = vmatpush.msra.mxu0 %v117
    %1178 = vmatpush.msra.mxu0 %v116
    %1179 = vmatpush.msra.mxu0 %v115
    %1180 = vmatpush.msra.mxu0 %v114
    %1181 = vmatpush.msra.mxu0 %v113
    %1182 = vmatpush.msra.mxu0 %v112
    %1183 = vmatpush.msra.mxu0 %v111
    %1184 = vmatpush.msra.mxu0 %v110
    %1185 = vmatpush.msra.mxu0 %v109
    %1186 = vmatmul.f32.gmra.mxu0 %v951
    %v1187 = vpop.f32.mrf.mxu0
    %v1188 = vadd.f32 %v1168, %v1187
    %1189 = vdwg.mxu0
    %1190 = vmatpush.msra.mxu0 %v140
    %1191 = vmatpush.msra.mxu0 %v139
    %1192 = vmatpush.msra.mxu0 %v138
    %1193 = vmatpush.msra.mxu0 %v137
    %1194 = vmatpush.msra.mxu0 %v136
    %1195 = vmatpush.msra.mxu0 %v135
    %1196 = vmatpush.msra.mxu0 %v134
    %1197 = vmatpush.msra.mxu0 %v133
    %1198 = vmatpush.msra.mxu0 %v132
    %1199 = vmatpush.msra.mxu0 %v131
    %1200 = vmatpush.msra.mxu0 %v130
    %1201 = vmatpush.msra.mxu0 %v129
    %1202 = vmatpush.msra.mxu0 %v128
    %1203 = vmatpush.msra.mxu0 %v127
    %1204 = vmatpush.msra.mxu0 %v126
    %1205 = vmatpush.msra.mxu0 %v125
    %1206 = vmatmul.f32.gmra.mxu0 %v952
    %v1207 = vpop.f32.mrf.mxu0
    %v1208 = vadd.f32 %v1188, %v1207
    %1209 = vdwg.mxu0
    %1210 = vmatpush.msra.mxu0 %v156
    %1211 = vmatpush.msra.mxu0 %v155
    %1212 = vmatpush.msra.mxu0 %v154
    %1213 = vmatpush.msra.mxu0 %v153
    %1214 = vmatpush.msra.mxu0 %v152
    %1215 = vmatpush.msra.mxu0 %v151
    %1216 = vmatpush.msra.mxu0 %v150
    %1217 = vmatpush.msra.mxu0 %v149
    %1218 = vmatpush.msra.mxu0 %v148
    %1219 = vmatpush.msra.mxu0 %v147
    %1220 = vmatpush.msra.mxu0 %v146
    %1221 = vmatpush.msra.mxu0 %v145
    %1222 = vmatpush.msra.mxu0 %v144
    %1223 = vmatpush.msra.mxu0 %v143
    %1224 = vmatpush.msra.mxu0 %v142
    %1225 = vmatpush.msra.mxu0 %v141
    %1226 = vmatmul.f32.gmra.mxu0 %v953
    %v1227 = vpop.f32.mrf.mxu0
    %v1228 = vadd.f32 %v1208, %v1227
    %1229 = vdwg.mxu0
    %1230 = vmatpush.msra.mxu0 %v172
    %1231 = vmatpush.msra.mxu0 %v171
    %1232 = vmatpush.msra.mxu0 %v170
    %1233 = vmatpush.msra.mxu0 %v169
    %1234 = vmatpush.msra.mxu0 %v168
    %1235 = vmatpush.msra.mxu0 %v167
    %1236 = vmatpush.msra.mxu0 %v166
    %1237 = vmatpush.msra.mxu0 %v165
    %1238 = vmatpush.msra.mxu0 %v164
    %1239 = vmatpush.msra.mxu0 %v163
    %1240 = vmatpush.msra.mxu0 %v162
    %1241 = vmatpush.msra.mxu0 %v161
    %1242 = vmatpush.msra.mxu0 %v160
    %1243 = vmatpush.msra.mxu0 %v159
    %1244 = vmatpush.msra.mxu0 %v158
    %1245 = vmatpush.msra.mxu0 %v157
    %1246 = vmatmul.f32.gmra.mxu0 %v956
    %v1247 = vpop.f32.mrf.mxu0
    %v1248 = vadd.f32 %v1228, %v1247
    %1249 = vdwg.mxu0
    %1250 = vmatpush.msra.mxu0 %v188
    %1251 = vmatpush.msra.mxu0 %v187
    %1252 = vmatpush.msra.mxu0 %v186
    %1253 = vmatpush.msra.mxu0 %v185
    %1254 = vmatpush.msra.mxu0 %v184
    %1255 = vmatpush.msra.mxu0 %v183
    %1256 = vmatpush.msra.mxu0 %v182
    %1257 = vmatpush.msra.mxu0 %v181
    %1258 = vmatpush.msra.mxu0 %v180
    %1259 = vmatpush.msra.mxu0 %v179
    %1260 = vmatpush.msra.mxu0 %v178
    %1261 = vmatpush.msra.mxu0 %v177
    %1262 = vmatpush.msra.mxu0 %v176
    %1263 = vmatpush.msra.mxu0 %v175
    %1264 = vmatpush.msra.mxu0 %v174
    %1265 = vmatpush.msra.mxu0 %v173
    %1266 = vmatmul.f32.gmra.mxu0 %v957
    %v1267 = vpop.f32.mrf.mxu0
    %v1268 = vadd.f32 %v1248, %v1267
    %1269 = vdwg.mxu0
    %1270 = vmatpush.msra.mxu0 %v204
    %1271 = vmatpush.msra.mxu0 %v203
    %1272 = vmatpush.msra.mxu0 %v202
    %1273 = vmatpush.msra.mxu0 %v201
    %1274 = vmatpush.msra.mxu0 %v200
    %1275 = vmatpush.msra.mxu0 %v199
    %1276 = vmatpush.msra.mxu0 %v198
    %1277 = vmatpush.msra.mxu0 %v197
    %1278 = vmatpush.msra.mxu0 %v196
    %1279 = vmatpush.msra.mxu0 %v195
    %1280 = vmatpush.msra.mxu0 %v194
    %1281 = vmatpush.msra.mxu0 %v193
    %1282 = vmatpush.msra.mxu0 %v192
    %1283 = vmatpush.msra.mxu0 %v191
    %1284 = vmatpush.msra.mxu0 %v190
    %1285 = vmatpush.msra.mxu0 %v189
    %1286 = vmatmul.f32.gmra.mxu0 %v958
    %v1287 = vpop.f32.mrf.mxu0
    %v1288 = vadd.f32 %v1268, %v1287
    %1289 = vdwg.mxu0
    %1290 = vmatpush.msra.mxu0 %v220
    %1291 = vmatpush.msra.mxu0 %v219
    %1292 = vmatpush.msra.mxu0 %v218
    %1293 = vmatpush.msra.mxu0 %v217
    %1294 = vmatpush.msra.mxu0 %v216
    %1295 = vmatpush.msra.mxu0 %v215
    %1296 = vmatpush.msra.mxu0 %v214
    %1297 = vmatpush.msra.mxu0 %v213
    %1298 = vmatpush.msra.mxu0 %v212
    %1299 = vmatpush.msra.mxu0 %v211
    %1300 = vmatpush.msra.mxu0 %v210
    %1301 = vmatpush.msra.mxu0 %v209
    %1302 = vmatpush.msra.mxu0 %v208
    %1303 = vmatpush.msra.mxu0 %v207
    %1304 = vmatpush.msra.mxu0 %v206
    %1305 = vmatpush.msra.mxu0 %v205
    %1306 = vmatmul.f32.gmra.mxu0 %v959
    %v1307 = vpop.f32.mrf.mxu0
    %v1308 = vadd.f32 %v1288, %v1307
    %1309 = vdwg.mxu0
    %1310 = vmatpush.msra.mxu0 %v236
    %1311 = vmatpush.msra.mxu0 %v235
    %1312 = vmatpush.msra.mxu0 %v234
    %1313 = vmatpush.msra.mxu0 %v233
    %1314 = vmatpush.msra.mxu0 %v232
    %1315 = vmatpush.msra.mxu0 %v231
    %1316 = vmatpush.msra.mxu0 %v230
    %1317 = vmatpush.msra.mxu0 %v229
    %1318 = vmatpush.msra.mxu0 %v228
    %1319 = vmatpush.msra.mxu0 %v227
    %1320 = vmatpush.msra.mxu0 %v226
    %1321 = vmatpush.msra.mxu0 %v225
    %1322 = vmatpush.msra.mxu0 %v224
    %1323 = vmatpush.msra.mxu0 %v223
    %1324 = vmatpush.msra.mxu0 %v222
    %1325 = vmatpush.msra.mxu0 %v221
    %1326 = vmatmul.f32.gmra.mxu0 %v960
    %v1327 = vpop.f32.mrf.mxu0
    %v1328 = vadd.f32 %v1308, %v1327
    %1329 = vdwg.mxu0
    %1330 = vmatpush.msra.mxu0 %v252
    %1331 = vmatpush.msra.mxu0 %v251
    %1332 = vmatpush.msra.mxu0 %v250
    %1333 = vmatpush.msra.mxu0 %v249
    %1334 = vmatpush.msra.mxu0 %v248
    %1335 = vmatpush.msra.mxu0 %v247
    %1336 = vmatpush.msra.mxu0 %v246
    %1337 = vmatpush.msra.mxu0 %v245
    %1338 = vmatpush.msra.mxu0 %v244
    %1339 = vmatpush.msra.mxu0 %v243
    %1340 = vmatpush.msra.mxu0 %v242
    %1341 = vmatpush.msra.mxu0 %v241
    %1342 = vmatpush.msra.mxu0 %v240
    %1343 = vmatpush.msra.mxu0 %v239
    %1344 = vmatpush.msra.mxu0 %v238
    %1345 = vmatpush.msra.mxu0 %v237
    %1346 = vmatmul.f32.gmra.mxu0 %v961
    %v1347 = vpop.f32.mrf.mxu0
    %v1348 = vadd.f32 %v1328, %v1347
    %1349 = vdwg.mxu0
    %1350 = vmatpush.msra.mxu0 %v268
    %1351 = vmatpush.msra.mxu0 %v267
    %1352 = vmatpush.msra.mxu0 %v266
    %1353 = vmatpush.msra.mxu0 %v265
    %1354 = vmatpush.msra.mxu0 %v264
    %1355 = vmatpush.msra.mxu0 %v263
    %1356 = vmatpush.msra.mxu0 %v262
    %1357 = vmatpush.msra.mxu0 %v261
    %1358 = vmatpush.msra.mxu0 %v260
    %1359 = vmatpush.msra.mxu0 %v259
    %1360 = vmatpush.msra.mxu0 %v258
    %1361 = vmatpush.msra.mxu0 %v257
    %1362 = vmatpush.msra.mxu0 %v256
    %1363 = vmatpush.msra.mxu0 %v255
    %1364 = vmatpush.msra.mxu0 %v254
    %1365 = vmatpush.msra.mxu0 %v253
    %1366 = vmatmul.f32.gmra.mxu0 %v962
    %v1367 = vpop.f32.mrf.mxu0
    %v1368 = vadd.f32 %v1348, %v1367
    %1369 = vdwg.mxu0
    %1370 = vmatpush.msra.mxu0 %v284
    %1371 = vmatpush.msra.mxu0 %v283
    %1372 = vmatpush.msra.mxu0 %v282
    %1373 = vmatpush.msra.mxu0 %v281
    %1374 = vmatpush.msra.mxu0 %v280
    %1375 = vmatpush.msra.mxu0 %v279
    %1376 = vmatpush.msra.mxu0 %v278
    %1377 = vmatpush.msra.mxu0 %v277
    %1378 = vmatpush.msra.mxu0 %v276
    %1379 = vmatpush.msra.mxu0 %v275
    %1380 = vmatpush.msra.mxu0 %v274
    %1381 = vmatpush.msra.mxu0 %v273
    %1382 = vmatpush.msra.mxu0 %v272
    %1383 = vmatpush.msra.mxu0 %v271
    %1384 = vmatpush.msra.mxu0 %v270
    %1385 = vmatpush.msra.mxu0 %v269
    %1386 = vmatmul.f32.gmra.mxu0 %v963
    %v1387 = vpop.f32.mrf.mxu0
    %v1388 = vadd.f32 %v1368, %v1387
    %1389 = vdwg.mxu0
    %1390 = vmatpush.msra.mxu0 %v300
    %1391 = vmatpush.msra.mxu0 %v299
    %1392 = vmatpush.msra.mxu0 %v298
    %1393 = vmatpush.msra.mxu0 %v297
    %1394 = vmatpush.msra.mxu0 %v296
    %1395 = vmatpush.msra.mxu0 %v295
    %1396 = vmatpush.msra.mxu0 %v294
    %1397 = vmatpush.msra.mxu0 %v293
    %1398 = vmatpush.msra.mxu0 %v292
    %1399 = vmatpush.msra.mxu0 %v291
    %1400 = vmatpush.msra.mxu0 %v290
    %1401 = vmatpush.msra.mxu0 %v289
    %1402 = vmatpush.msra.mxu0 %v288
    %1403 = vmatpush.msra.mxu0 %v287
    %1404 = vmatpush.msra.mxu0 %v286
    %1405 = vmatpush.msra.mxu0 %v285
    %1406 = vmatmul.f32.gmra.mxu0 %v966
    %v1407 = vpop.f32.mrf.mxu0
    %v1408 = vadd.f32 %v1388, %v1407
    %1409 = vdwg.mxu0
    %1410 = vmatpush.msra.mxu0 %v316
    %1411 = vmatpush.msra.mxu0 %v315
    %1412 = vmatpush.msra.mxu0 %v314
    %1413 = vmatpush.msra.mxu0 %v313
    %1414 = vmatpush.msra.mxu0 %v312
    %1415 = vmatpush.msra.mxu0 %v311
    %1416 = vmatpush.msra.mxu0 %v310
    %1417 = vmatpush.msra.mxu0 %v309
    %1418 = vmatpush.msra.mxu0 %v308
    %1419 = vmatpush.msra.mxu0 %v307
    %1420 = vmatpush.msra.mxu0 %v306
    %1421 = vmatpush.msra.mxu0 %v305
    %1422 = vmatpush.msra.mxu0 %v304
    %1423 = vmatpush.msra.mxu0 %v303
    %1424 = vmatpush.msra.mxu0 %v302
    %1425 = vmatpush.msra.mxu0 %v301
    %1426 = vmatmul.f32.gmra.mxu0 %v967
    %v1427 = vpop.f32.mrf.mxu0
    %v1428 = vadd.f32 %v1408, %v1427
    %1429 = vdwg.mxu0
    %1430 = vmatpush.msra.mxu0 %v332
    %1431 = vmatpush.msra.mxu0 %v331
    %1432 = vmatpush.msra.mxu0 %v330
    %1433 = vmatpush.msra.mxu0 %v329
    %1434 = vmatpush.msra.mxu0 %v328
    %1435 = vmatpush.msra.mxu0 %v327
    %1436 = vmatpush.msra.mxu0 %v326
    %1437 = vmatpush.msra.mxu0 %v325
    %1438 = vmatpush.msra.mxu0 %v324
    %1439 = vmatpush.msra.mxu0 %v323
    %1440 = vmatpush.msra.mxu0 %v322
    %1441 = vmatpush.msra.mxu0 %v321
    %1442 = vmatpush.msra.mxu0 %v320
    %1443 = vmatpush.msra.mxu0 %v319
    %1444 = vmatpush.msra.mxu0 %v318
    %1445 = vmatpush.msra.mxu0 %v317
    %1446 = vmatmul.f32.gmra.mxu0 %v968
    %v1447 = vpop.f32.mrf.mxu0
    %v1448 = vadd.f32 %v1428, %v1447
    %1449 = vdwg.mxu0
    %1450 = vmatpush.msra.mxu0 %v348
    %1451 = vmatpush.msra.mxu0 %v347
    %1452 = vmatpush.msra.mxu0 %v346
    %1453 = vmatpush.msra.mxu0 %v345
    %1454 = vmatpush.msra.mxu0 %v344
    %1455 = vmatpush.msra.mxu0 %v343
    %1456 = vmatpush.msra.mxu0 %v342
    %1457 = vmatpush.msra.mxu0 %v341
    %1458 = vmatpush.msra.mxu0 %v340
    %1459 = vmatpush.msra.mxu0 %v339
    %1460 = vmatpush.msra.mxu0 %v338
    %1461 = vmatpush.msra.mxu0 %v337
    %1462 = vmatpush.msra.mxu0 %v336
    %1463 = vmatpush.msra.mxu0 %v335
    %1464 = vmatpush.msra.mxu0 %v334
    %1465 = vmatpush.msra.mxu0 %v333
    %1466 = vmatmul.f32.gmra.mxu0 %v969
    %v1467 = vpop.f32.mrf.mxu0
    %v1468 = vadd.f32 %v1448, %v1467
    %1469 = vdwg.mxu0
    %1470 = vmatpush.msra.mxu0 %v364
    %1471 = vmatpush.msra.mxu0 %v363
    %1472 = vmatpush.msra.mxu0 %v362
    %1473 = vmatpush.msra.mxu0 %v361
    %1474 = vmatpush.msra.mxu0 %v360
    %1475 = vmatpush.msra.mxu0 %v359
    %1476 = vmatpush.msra.mxu0 %v358
    %1477 = vmatpush.msra.mxu0 %v357
    %1478 = vmatpush.msra.mxu0 %v356
    %1479 = vmatpush.msra.mxu0 %v355
    %1480 = vmatpush.msra.mxu0 %v354
    %1481 = vmatpush.msra.mxu0 %v353
    %1482 = vmatpush.msra.mxu0 %v352
    %1483 = vmatpush.msra.mxu0 %v351
    %1484 = vmatpush.msra.mxu0 %v350
    %1485 = vmatpush.msra.mxu0 %v349
    %1486 = vmatmul.f32.gmra.mxu0 %v970
    %v1487 = vpop.f32.mrf.mxu0
    %v1488 = vadd.f32 %v1468, %v1487
    %1489 = vdwg.mxu0
    %1490 = vmatpush.msra.mxu0 %v380
    %1491 = vmatpush.msra.mxu0 %v379
    %1492 = vmatpush.msra.mxu0 %v378
    %1493 = vmatpush.msra.mxu0 %v377
    %1494 = vmatpush.msra.mxu0 %v376
    %1495 = vmatpush.msra.mxu0 %v375
    %1496 = vmatpush.msra.mxu0 %v374
    %1497 = vmatpush.msra.mxu0 %v373
    %1498 = vmatpush.msra.mxu0 %v372
    %1499 = vmatpush.msra.mxu0 %v371
    %1500 = vmatpush.msra.mxu0 %v370
    %1501 = vmatpush.msra.mxu0 %v369
    %1502 = vmatpush.msra.mxu0 %v368
    %1503 = vmatpush.msra.mxu0 %v367
    %1504 = vmatpush.msra.mxu0 %v366
    %1505 = vmatpush.msra.mxu0 %v365
    %1506 = vmatmul.f32.gmra.mxu0 %v971
    %v1507 = vpop.f32.mrf.mxu0
    %v1508 = vadd.f32 %v1488, %v1507
    %1509 = vdwg.mxu0
    %1510 = vmatpush.msra.mxu0 %v396
    %1511 = vmatpush.msra.mxu0 %v395
    %1512 = vmatpush.msra.mxu0 %v394
    %1513 = vmatpush.msra.mxu0 %v393
    %1514 = vmatpush.msra.mxu0 %v392
    %1515 = vmatpush.msra.mxu0 %v391
    %1516 = vmatpush.msra.mxu0 %v390
    %1517 = vmatpush.msra.mxu0 %v389
    %1518 = vmatpush.msra.mxu0 %v388
    %1519 = vmatpush.msra.mxu0 %v387
    %1520 = vmatpush.msra.mxu0 %v386
    %1521 = vmatpush.msra.mxu0 %v385
    %1522 = vmatpush.msra.mxu0 %v384
    %1523 = vmatpush.msra.mxu0 %v383
    %1524 = vmatpush.msra.mxu0 %v382
    %1525 = vmatpush.msra.mxu0 %v381
    %1526 = vmatmul.f32.gmra.mxu0 %v972
    %v1527 = vpop.f32.mrf.mxu0
    %v1528 = vadd.f32 %v1508, %v1527
    %1529 = vdwg.mxu0
    %1530 = vmatpush.msra.mxu0 %v412
    %1531 = vmatpush.msra.mxu0 %v411
    %1532 = vmatpush.msra.mxu0 %v410
    %1533 = vmatpush.msra.mxu0 %v409
    %1534 = vmatpush.msra.mxu0 %v408
    %1535 = vmatpush.msra.mxu0 %v407
    %1536 = vmatpush.msra.mxu0 %v406
    %1537 = vmatpush.msra.mxu0 %v405
    %1538 = vmatpush.msra.mxu0 %v404
    %1539 = vmatpush.msra.mxu0 %v403
    %1540 = vmatpush.msra.mxu0 %v402
    %1541 = vmatpush.msra.mxu0 %v401
    %1542 = vmatpush.msra.mxu0 %v400
    %1543 = vmatpush.msra.mxu0 %v399
    %1544 = vmatpush.msra.mxu0 %v398
    %1545 = vmatpush.msra.mxu0 %v397
    %1546 = vmatmul.f32.gmra.mxu0 %v973
    %v1547 = vpop.f32.mrf.mxu0
    %v1548 = vadd.f32 %v1528, %v1547
    %1549 = vdwg.mxu0
    %1550 = vmatpush.msra.mxu0 %v428
    %1551 = vmatpush.msra.mxu0 %v427
    %1552 = vmatpush.msra.mxu0 %v426
    %1553 = vmatpush.msra.mxu0 %v425
    %1554 = vmatpush.msra.mxu0 %v424
    %1555 = vmatpush.msra.mxu0 %v423
    %1556 = vmatpush.msra.mxu0 %v422
    %1557 = vmatpush.msra.mxu0 %v421
    %1558 = vmatpush.msra.mxu0 %v420
    %1559 = vmatpush.msra.mxu0 %v419
    %1560 = vmatpush.msra.mxu0 %v418
    %1561 = vmatpush.msra.mxu0 %v417
    %1562 = vmatpush.msra.mxu0 %v416
    %1563 = vmatpush.msra.mxu0 %v415
    %1564 = vmatpush.msra.mxu0 %v414
    %1565 = vmatpush.msra.mxu0 %v413
    %1566 = vmatmul.f32.gmra.mxu0 %v976
    %v1567 = vpop.f32.mrf.mxu0
    %v1568 = vadd.f32 %v1548, %v1567
    %1569 = vdwg.mxu0
    %1570 = vmatpush.msra.mxu0 %v444
    %1571 = vmatpush.msra.mxu0 %v443
    %1572 = vmatpush.msra.mxu0 %v442
    %1573 = vmatpush.msra.mxu0 %v441
    %1574 = vmatpush.msra.mxu0 %v440
    %1575 = vmatpush.msra.mxu0 %v439
    %1576 = vmatpush.msra.mxu0 %v438
    %1577 = vmatpush.msra.mxu0 %v437
    %1578 = vmatpush.msra.mxu0 %v436
    %1579 = vmatpush.msra.mxu0 %v435
    %1580 = vmatpush.msra.mxu0 %v434
    %1581 = vmatpush.msra.mxu0 %v433
    %1582 = vmatpush.msra.mxu0 %v432
    %1583 = vmatpush.msra.mxu0 %v431
    %1584 = vmatpush.msra.mxu0 %v430
    %1585 = vmatpush.msra.mxu0 %v429
    %1586 = vmatmul.f32.gmra.mxu0 %v977
    %v1587 = vpop.f32.mrf.mxu0
    %v1588 = vadd.f32 %v1568, %v1587
    %1589 = vdwg.mxu0
    %1590 = vmatpush.msra.mxu0 %v460
    %1591 = vmatpush.msra.mxu0 %v459
    %1592 = vmatpush.msra.mxu0 %v458
    %1593 = vmatpush.msra.mxu0 %v457
    %1594 = vmatpush.msra.mxu0 %v456
    %1595 = vmatpush.msra.mxu0 %v455
    %1596 = vmatpush.msra.mxu0 %v454
    %1597 = vmatpush.msra.mxu0 %v453
    %1598 = vmatpush.msra.mxu0 %v452
    %1599 = vmatpush.msra.mxu0 %v451
    %1600 = vmatpush.msra.mxu0 %v450
    %1601 = vmatpush.msra.mxu0 %v449
    %1602 = vmatpush.msra.mxu0 %v448
    %1603 = vmatpush.msra.mxu0 %v447
    %1604 = vmatpush.msra.mxu0 %v446
    %1605 = vmatpush.msra.mxu0 %v445
    %1606 = vmatmul.f32.gmra.mxu0 %v978
    %v1607 = vpop.f32.mrf.mxu0
    %v1608 = vadd.f32 %v1588, %v1607
    %1609 = vdwg.mxu0
    %1610 = vmatpush.msra.mxu0 %v476
    %1611 = vmatpush.msra.mxu0 %v475
    %1612 = vmatpush.msra.mxu0 %v474
    %1613 = vmatpush.msra.mxu0 %v473
    %1614 = vmatpush.msra.mxu0 %v472
    %1615 = vmatpush.msra.mxu0 %v471
    %1616 = vmatpush.msra.mxu0 %v470
    %1617 = vmatpush.msra.mxu0 %v469
    %1618 = vmatpush.msra.mxu0 %v468
    %1619 = vmatpush.msra.mxu0 %v467
    %1620 = vmatpush.msra.mxu0 %v466
    %1621 = vmatpush.msra.mxu0 %v465
    %1622 = vmatpush.msra.mxu0 %v464
    %1623 = vmatpush.msra.mxu0 %v463
    %1624 = vmatpush.msra.mxu0 %v462
    %1625 = vmatpush.msra.mxu0 %v461
    %1626 = vmatmul.f32.gmra.mxu0 %v979
    %v1627 = vpop.f32.mrf.mxu0
    %v1628 = vadd.f32 %v1608, %v1627
    %1629 = vdwg.mxu0
    %1630 = vmatpush.msra.mxu0 %v492
    %1631 = vmatpush.msra.mxu0 %v491
    %1632 = vmatpush.msra.mxu0 %v490
    %1633 = vmatpush.msra.mxu0 %v489
    %1634 = vmatpush.msra.mxu0 %v488
    %1635 = vmatpush.msra.mxu0 %v487
    %1636 = vmatpush.msra.mxu0 %v486
    %1637 = vmatpush.msra.mxu0 %v485
    %1638 = vmatpush.msra.mxu0 %v484
    %1639 = vmatpush.msra.mxu0 %v483
    %1640 = vmatpush.msra.mxu0 %v482
    %1641 = vmatpush.msra.mxu0 %v481
    %1642 = vmatpush.msra.mxu0 %v480
    %1643 = vmatpush.msra.mxu0 %v479
    %1644 = vmatpush.msra.mxu0 %v478
    %1645 = vmatpush.msra.mxu0 %v477
    %1646 = vmatmul.f32.gmra.mxu0 %v980
    %v1647 = vpop.f32.mrf.mxu0
    %v1648 = vadd.f32 %v1628, %v1647
    %1649 = vdwg.mxu0
    %1650 = vmatpush.msra.mxu0 %v508
    %1651 = vmatpush.msra.mxu0 %v507
    %1652 = vmatpush.msra.mxu0 %v506
    %1653 = vmatpush.msra.mxu0 %v505
    %1654 = vmatpush.msra.mxu0 %v504
    %1655 = vmatpush.msra.mxu0 %v503
    %1656 = vmatpush.msra.mxu0 %v502
    %1657 = vmatpush.msra.mxu0 %v501
    %1658 = vmatpush.msra.mxu0 %v500
    %1659 = vmatpush.msra.mxu0 %v499
    %1660 = vmatpush.msra.mxu0 %v498
    %1661 = vmatpush.msra.mxu0 %v497
    %1662 = vmatpush.msra.mxu0 %v496
    %1663 = vmatpush.msra.mxu0 %v495
    %1664 = vmatpush.msra.mxu0 %v494
    %1665 = vmatpush.msra.mxu0 %v493
    %1666 = vmatmul.f32.gmra.mxu0 %v981
    %v1667 = vpop.f32.mrf.mxu0
    %v1668 = vadd.f32 %v1648, %v1667
    %1669 = vdwg.mxu0
    %1670 = vmatpush.msra.mxu0 %v524
    %1671 = vmatpush.msra.mxu0 %v523
    %1672 = vmatpush.msra.mxu0 %v522
    %1673 = vmatpush.msra.mxu0 %v521
    %1674 = vmatpush.msra.mxu0 %v520
    %1675 = vmatpush.msra.mxu0 %v519
    %1676 = vmatpush.msra.mxu0 %v518
    %1677 = vmatpush.msra.mxu0 %v517
    %1678 = vmatpush.msra.mxu0 %v516
    %1679 = vmatpush.msra.mxu0 %v515
    %1680 = vmatpush.msra.mxu0 %v514
    %1681 = vmatpush.msra.mxu0 %v513
    %1682 = vmatpush.msra.mxu0 %v512
    %1683 = vmatpush.msra.mxu0 %v511
    %1684 = vmatpush.msra.mxu0 %v510
    %1685 = vmatpush.msra.mxu0 %v509
    %1686 = vmatmul.f32.gmra.mxu0 %v982
    %v1687 = vpop.f32.mrf.mxu0
    %v1688 = vadd.f32 %v1668, %v1687
    %1689 = vdwg.mxu0
    %1690 = vmatpush.msra.mxu0 %v540
    %1691 = vmatpush.msra.mxu0 %v539
    %1692 = vmatpush.msra.mxu0 %v538
    %1693 = vmatpush.msra.mxu0 %v537
    %1694 = vmatpush.msra.mxu0 %v536
    %1695 = vmatpush.msra.mxu0 %v535
    %1696 = vmatpush.msra.mxu0 %v534
    %1697 = vmatpush.msra.mxu0 %v533
    %1698 = vmatpush.msra.mxu0 %v532
    %1699 = vmatpush.msra.mxu0 %v531
    %1700 = vmatpush.msra.mxu0 %v530
    %1701 = vmatpush.msra.mxu0 %v529
    %1702 = vmatpush.msra.mxu0 %v528
    %1703 = vmatpush.msra.mxu0 %v527
    %1704 = vmatpush.msra.mxu0 %v526
    %1705 = vmatpush.msra.mxu0 %v525
    %1706 = vmatmul.f32.gmra.mxu0 %v983
    %v1707 = vpop.f32.mrf.mxu0
    %v1708 = vadd.f32 %v1688, %v1707
    %1709 = vdwg.mxu0
    %1710 = vmatpush.msra.mxu0 %v556
    %1711 = vmatpush.msra.mxu0 %v555
    %1712 = vmatpush.msra.mxu0 %v554
    %1713 = vmatpush.msra.mxu0 %v553
    %1714 = vmatpush.msra.mxu0 %v552
    %1715 = vmatpush.msra.mxu0 %v551
    %1716 = vmatpush.msra.mxu0 %v550
    %1717 = vmatpush.msra.mxu0 %v549
    %1718 = vmatpush.msra.mxu0 %v548
    %1719 = vmatpush.msra.mxu0 %v547
    %1720 = vmatpush.msra.mxu0 %v546
    %1721 = vmatpush.msra.mxu0 %v545
    %1722 = vmatpush.msra.mxu0 %v544
    %1723 = vmatpush.msra.mxu0 %v543
    %1724 = vmatpush.msra.mxu0 %v542
    %1725 = vmatpush.msra.mxu0 %v541
    %1726 = vmatmul.f32.gmra.mxu0 %v986
    %v1727 = vpop.f32.mrf.mxu0
    %v1728 = vadd.f32 %v1708, %v1727
    %1729 = vdwg.mxu0
    %1730 = vmatpush.msra.mxu0 %v572
    %1731 = vmatpush.msra.mxu0 %v571
    %1732 = vmatpush.msra.mxu0 %v570
    %1733 = vmatpush.msra.mxu0 %v569
    %1734 = vmatpush.msra.mxu0 %v568
    %1735 = vmatpush.msra.mxu0 %v567
    %1736 = vmatpush.msra.mxu0 %v566
    %1737 = vmatpush.msra.mxu0 %v565
    %1738 = vmatpush.msra.mxu0 %v564
    %1739 = vmatpush.msra.mxu0 %v563
    %1740 = vmatpush.msra.mxu0 %v562
    %1741 = vmatpush.msra.mxu0 %v561
    %1742 = vmatpush.msra.mxu0 %v560
    %1743 = vmatpush.msra.mxu0 %v559
    %1744 = vmatpush.msra.mxu0 %v558
    %1745 = vmatpush.msra.mxu0 %v557
    %1746 = vmatmul.f32.gmra.mxu0 %v987
    %v1747 = vpop.f32.mrf.mxu0
    %v1748 = vadd.f32 %v1728, %v1747
    %1749 = vdwg.mxu0
    %1750 = vmatpush.msra.mxu0 %v588
    %1751 = vmatpush.msra.mxu0 %v587
    %1752 = vmatpush.msra.mxu0 %v586
    %1753 = vmatpush.msra.mxu0 %v585
    %1754 = vmatpush.msra.mxu0 %v584
    %1755 = vmatpush.msra.mxu0 %v583
    %1756 = vmatpush.msra.mxu0 %v582
    %1757 = vmatpush.msra.mxu0 %v581
    %1758 = vmatpush.msra.mxu0 %v580
    %1759 = vmatpush.msra.mxu0 %v579
    %1760 = vmatpush.msra.mxu0 %v578
    %1761 = vmatpush.msra.mxu0 %v577
    %1762 = vmatpush.msra.mxu0 %v576
    %1763 = vmatpush.msra.mxu0 %v575
    %1764 = vmatpush.msra.mxu0 %v574
    %1765 = vmatpush.msra.mxu0 %v573
    %1766 = vmatmul.f32.gmra.mxu0 %v988
    %v1767 = vpop.f32.mrf.mxu0
    %v1768 = vadd.f32 %v1748, %v1767
    %1769 = vdwg.mxu0
    %1770 = vmatpush.msra.mxu0 %v604
    %1771 = vmatpush.msra.mxu0 %v603
    %1772 = vmatpush.msra.mxu0 %v602
    %1773 = vmatpush.msra.mxu0 %v601
    %1774 = vmatpush.msra.mxu0 %v600
    %1775 = vmatpush.msra.mxu0 %v599
    %1776 = vmatpush.msra.mxu0 %v598
    %1777 = vmatpush.msra.mxu0 %v597
    %1778 = vmatpush.msra.mxu0 %v596
    %1779 = vmatpush.msra.mxu0 %v595
    %1780 = vmatpush.msra.mxu0 %v594
    %1781 = vmatpush.msra.mxu0 %v593
    %1782 = vmatpush.msra.mxu0 %v592
    %1783 = vmatpush.msra.mxu0 %v591
    %1784 = vmatpush.msra.mxu0 %v590
    %1785 = vmatpush.msra.mxu0 %v589
    %1786 = vmatmul.f32.gmra.mxu0 %v989
    %v1787 = vpop.f32.mrf.mxu0
    %v1788 = vadd.f32 %v1768, %v1787
    %1789 = vdwg.mxu0
    %1790 = vmatpush.msra.mxu0 %v620
    %1791 = vmatpush.msra.mxu0 %v619
    %1792 = vmatpush.msra.mxu0 %v618
    %1793 = vmatpush.msra.mxu0 %v617
    %1794 = vmatpush.msra.mxu0 %v616
    %1795 = vmatpush.msra.mxu0 %v615
    %1796 = vmatpush.msra.mxu0 %v614
    %1797 = vmatpush.msra.mxu0 %v613
    %1798 = vmatpush.msra.mxu0 %v612
    %1799 = vmatpush.msra.mxu0 %v611
    %1800 = vmatpush.msra.mxu0 %v610
    %1801 = vmatpush.msra.mxu0 %v609
    %1802 = vmatpush.msra.mxu0 %v608
    %1803 = vmatpush.msra.mxu0 %v607
    %1804 = vmatpush.msra.mxu0 %v606
    %1805 = vmatpush.msra.mxu0 %v605
    %1806 = vmatmul.f32.gmra.mxu0 %v990
    %v1807 = vpop.f32.mrf.mxu0
    %v1808 = vadd.f32 %v1788, %v1807
    %1809 = vdwg.mxu0
    %1810 = vmatpush.msra.mxu0 %v636
    %1811 = vmatpush.msra.mxu0 %v635
    %1812 = vmatpush.msra.mxu0 %v634
    %1813 = vmatpush.msra.mxu0 %v633
    %1814 = vmatpush.msra.mxu0 %v632
    %1815 = vmatpush.msra.mxu0 %v631
    %1816 = vmatpush.msra.mxu0 %v630
    %1817 = vmatpush.msra.mxu0 %v629
    %1818 = vmatpush.msra.mxu0 %v628
    %1819 = vmatpush.msra.mxu0 %v627
    %1820 = vmatpush.msra.mxu0 %v626
    %1821 = vmatpush.msra.mxu0 %v625
    %1822 = vmatpush.msra.mxu0 %v624
    %1823 = vmatpush.msra.mxu0 %v623
    %1824 = vmatpush.msra.mxu0 %v622
    %1825 = vmatpush.msra.mxu0 %v621
    %1826 = vmatmul.f32.gmra.mxu0 %v991
    %v1827 = vpop.f32.mrf.mxu0
    %v1828 = vadd.f32 %v1808, %v1827
    %1829 = vdwg.mxu0
    %1830 = vmatpush.msra.mxu0 %v652
    %1831 = vmatpush.msra.mxu0 %v651
    %1832 = vmatpush.msra.mxu0 %v650
    %1833 = vmatpush.msra.mxu0 %v649
    %1834 = vmatpush.msra.mxu0 %v648
    %1835 = vmatpush.msra.mxu0 %v647
    %1836 = vmatpush.msra.mxu0 %v646
    %1837 = vmatpush.msra.mxu0 %v645
    %1838 = vmatpush.msra.mxu0 %v644
    %1839 = vmatpush.msra.mxu0 %v643
    %1840 = vmatpush.msra.mxu0 %v642
    %1841 = vmatpush.msra.mxu0 %v641
    %1842 = vmatpush.msra.mxu0 %v640
    %1843 = vmatpush.msra.mxu0 %v639
    %1844 = vmatpush.msra.mxu0 %v638
    %1845 = vmatpush.msra.mxu0 %v637
    %1846 = vmatmul.f32.gmra.mxu0 %v992
    %v1847 = vpop.f32.mrf.mxu0
    %v1848 = vadd.f32 %v1828, %v1847
    %1849 = vdwg.mxu0
    %1850 = vmatpush.msra.mxu0 %v668
    %1851 = vmatpush.msra.mxu0 %v667
    %1852 = vmatpush.msra.mxu0 %v666
    %1853 = vmatpush.msra.mxu0 %v665
    %1854 = vmatpush.msra.mxu0 %v664
    %1855 = vmatpush.msra.mxu0 %v663
    %1856 = vmatpush.msra.mxu0 %v662
    %1857 = vmatpush.msra.mxu0 %v661
    %1858 = vmatpush.msra.mxu0 %v660
    %1859 = vmatpush.msra.mxu0 %v659
    %1860 = vmatpush.msra.mxu0 %v658
    %1861 = vmatpush.msra.mxu0 %v657
    %1862 = vmatpush.msra.mxu0 %v656
    %1863 = vmatpush.msra.mxu0 %v655
    %1864 = vmatpush.msra.mxu0 %v654
    %1865 = vmatpush.msra.mxu0 %v653
    %1866 = vmatmul.f32.gmra.mxu0 %v993
    %v1867 = vpop.f32.mrf.mxu0
    %v1868 = vadd.f32 %v1848, %v1867
    %1869 = vdwg.mxu0
    %1870 = vmatpush.msra.mxu0 %v684
    %1871 = vmatpush.msra.mxu0 %v683
    %1872 = vmatpush.msra.mxu0 %v682
    %1873 = vmatpush.msra.mxu0 %v681
    %1874 = vmatpush.msra.mxu0 %v680
    %1875 = vmatpush.msra.mxu0 %v679
    %1876 = vmatpush.msra.mxu0 %v678
    %1877 = vmatpush.msra.mxu0 %v677
    %1878 = vmatpush.msra.mxu0 %v676
    %1879 = vmatpush.msra.mxu0 %v675
    %1880 = vmatpush.msra.mxu0 %v674
    %1881 = vmatpush.msra.mxu0 %v673
    %1882 = vmatpush.msra.mxu0 %v672
    %1883 = vmatpush.msra.mxu0 %v671
    %1884 = vmatpush.msra.mxu0 %v670
    %1885 = vmatpush.msra.mxu0 %v669
    %1886 = vmatmul.f32.gmra.mxu0 %v996
    %v1887 = vpop.f32.mrf.mxu0
    %v1888 = vadd.f32 %v1868, %v1887
    %1889 = vdwg.mxu0
    %1890 = vmatpush.msra.mxu0 %v700
    %1891 = vmatpush.msra.mxu0 %v699
    %1892 = vmatpush.msra.mxu0 %v698
    %1893 = vmatpush.msra.mxu0 %v697
    %1894 = vmatpush.msra.mxu0 %v696
    %1895 = vmatpush.msra.mxu0 %v695
    %1896 = vmatpush.msra.mxu0 %v694
    %1897 = vmatpush.msra.mxu0 %v693
    %1898 = vmatpush.msra.mxu0 %v692
    %1899 = vmatpush.msra.mxu0 %v691
    %1900 = vmatpush.msra.mxu0 %v690
    %1901 = vmatpush.msra.mxu0 %v689
    %1902 = vmatpush.msra.mxu0 %v688
    %1903 = vmatpush.msra.mxu0 %v687
    %1904 = vmatpush.msra.mxu0 %v686
    %1905 = vmatpush.msra.mxu0 %v685
    %1906 = vmatmul.f32.gmra.mxu0 %v997
    %v1907 = vpop.f32.mrf.mxu0
    %v1908 = vadd.f32 %v1888, %v1907
    %1909 = vdwg.mxu0
    %1910 = vmatpush.msra.mxu0 %v716
    %1911 = vmatpush.msra.mxu0 %v715
    %1912 = vmatpush.msra.mxu0 %v714
    %1913 = vmatpush.msra.mxu0 %v713
    %1914 = vmatpush.msra.mxu0 %v712
    %1915 = vmatpush.msra.mxu0 %v711
    %1916 = vmatpush.msra.mxu0 %v710
    %1917 = vmatpush.msra.mxu0 %v709
    %1918 = vmatpush.msra.mxu0 %v708
    %1919 = vmatpush.msra.mxu0 %v707
    %1920 = vmatpush.msra.mxu0 %v706
    %1921 = vmatpush.msra.mxu0 %v705
    %1922 = vmatpush.msra.mxu0 %v704
    %1923 = vmatpush.msra.mxu0 %v703
    %1924 = vmatpush.msra.mxu0 %v702
    %1925 = vmatpush.msra.mxu0 %v701
    %1926 = vmatmul.f32.gmra.mxu0 %v998
    %v1927 = vpop.f32.mrf.mxu0
    %v1928 = vadd.f32 %v1908, %v1927
    %1929 = vdwg.mxu0
    %1930 = vmatpush.msra.mxu0 %v732
    %1931 = vmatpush.msra.mxu0 %v731
    %1932 = vmatpush.msra.mxu0 %v730
    %1933 = vmatpush.msra.mxu0 %v729
    %1934 = vmatpush.msra.mxu0 %v728
    %1935 = vmatpush.msra.mxu0 %v727
    %1936 = vmatpush.msra.mxu0 %v726
    %1937 = vmatpush.msra.mxu0 %v725
    %1938 = vmatpush.msra.mxu0 %v724
    %1939 = vmatpush.msra.mxu0 %v723
    %1940 = vmatpush.msra.mxu0 %v722
    %1941 = vmatpush.msra.mxu0 %v721
    %1942 = vmatpush.msra.mxu0 %v720
    %1943 = vmatpush.msra.mxu0 %v719
    %1944 = vmatpush.msra.mxu0 %v718
    %1945 = vmatpush.msra.mxu0 %v717
    %1946 = vmatmul.f32.gmra.mxu0 %v999
    %v1947 = vpop.f32.mrf.mxu0
    %v1948 = vadd.f32 %v1928, %v1947
    %1949 = vdwg.mxu0
    %1950 = vmatpush.msra.mxu0 %v748
    %1951 = vmatpush.msra.mxu0 %v747
    %1952 = vmatpush.msra.mxu0 %v746
    %1953 = vmatpush.msra.mxu0 %v745
    %1954 = vmatpush.msra.mxu0 %v744
    %1955 = vmatpush.msra.mxu0 %v743
    %1956 = vmatpush.msra.mxu0 %v742
    %1957 = vmatpush.msra.mxu0 %v741
    %1958 = vmatpush.msra.mxu0 %v740
    %1959 = vmatpush.msra.mxu0 %v739
    %1960 = vmatpush.msra.mxu0 %v738
    %1961 = vmatpush.msra.mxu0 %v737
    %1962 = vmatpush.msra.mxu0 %v736
    %1963 = vmatpush.msra.mxu0 %v735
    %1964 = vmatpush.msra.mxu0 %v734
    %1965 = vmatpush.msra.mxu0 %v733
    %1966 = vmatmul.f32.gmra.mxu0 %v1000
    %v1967 = vpop.f32.mrf.mxu0
    %v1968 = vadd.f32 %v1948, %v1967
    %1969 = vdwg.mxu0
    %1970 = vmatpush.msra.mxu0 %v764
    %1971 = vmatpush.msra.mxu0 %v763
    %1972 = vmatpush.msra.mxu0 %v762
    %1973 = vmatpush.msra.mxu0 %v761
    %1974 = vmatpush.msra.mxu0 %v760
    %1975 = vmatpush.msra.mxu0 %v759
    %1976 = vmatpush.msra.mxu0 %v758
    %1977 = vmatpush.msra.mxu0 %v757
    %1978 = vmatpush.msra.mxu0 %v756
    %1979 = vmatpush.msra.mxu0 %v755
    %1980 = vmatpush.msra.mxu0 %v754
    %1981 = vmatpush.msra.mxu0 %v753
    %1982 = vmatpush.msra.mxu0 %v752
    %1983 = vmatpush.msra.mxu0 %v751
    %1984 = vmatpush.msra.mxu0 %v750
    %1985 = vmatpush.msra.mxu0 %v749
    %1986 = vmatmul.f32.gmra.mxu0 %v1001
    %v1987 = vpop.f32.mrf.mxu0
    %v1988 = vadd.f32 %v1968, %v1987
    %1989 = vdwg.mxu0
    %1990 = vmatpush.msra.mxu0 %v780
    %1991 = vmatpush.msra.mxu0 %v779
    %1992 = vmatpush.msra.mxu0 %v778
    %1993 = vmatpush.msra.mxu0 %v777
    %1994 = vmatpush.msra.mxu0 %v776
    %1995 = vmatpush.msra.mxu0 %v775
    %1996 = vmatpush.msra.mxu0 %v774
    %1997 = vmatpush.msra.mxu0 %v773
    %1998 = vmatpush.msra.mxu0 %v772
    %1999 = vmatpush.msra.mxu0 %v771
    %2000 = vmatpush.msra.mxu0 %v770
    %2001 = vmatpush.msra.mxu0 %v769
    %2002 = vmatpush.msra.mxu0 %v768
    %2003 = vmatpush.msra.mxu0 %v767
    %2004 = vmatpush.msra.mxu0 %v766
    %2005 = vmatpush.msra.mxu0 %v765
    %2006 = vmatmul.f32.gmra.mxu0 %v1002
    %v2007 = vpop.f32.mrf.mxu0
    %v2008 = vadd.f32 %v1988, %v2007
    %2009 = vdwg.mxu0
    %2010 = vmatpush.msra.mxu0 %v796
    %2011 = vmatpush.msra.mxu0 %v795
    %2012 = vmatpush.msra.mxu0 %v794
    %2013 = vmatpush.msra.mxu0 %v793
    %2014 = vmatpush.msra.mxu0 %v792
    %2015 = vmatpush.msra.mxu0 %v791
    %2016 = vmatpush.msra.mxu0 %v790
    %2017 = vmatpush.msra.mxu0 %v789
    %2018 = vmatpush.msra.mxu0 %v788
    %2019 = vmatpush.msra.mxu0 %v787
    %2020 = vmatpush.msra.mxu0 %v786
    %2021 = vmatpush.msra.mxu0 %v785
    %2022 = vmatpush.msra.mxu0 %v784
    %2023 = vmatpush.msra.mxu0 %v783
    %2024 = vmatpush.msra.mxu0 %v782
    %2025 = vmatpush.msra.mxu0 %v781
    %2026 = vmatmul.f32.gmra.mxu0 %v1003
    %v2027 = vpop.f32.mrf.mxu0
    %v2028 = vadd.f32 %v2008, %v2027
    %2029 = vdwg.mxu0
    %2030 = vmatpush.msra.mxu0 %v812
    %2031 = vmatpush.msra.mxu0 %v811
    %2032 = vmatpush.msra.mxu0 %v810
    %2033 = vmatpush.msra.mxu0 %v809
    %2034 = vmatpush.msra.mxu0 %v808
    %2035 = vmatpush.msra.mxu0 %v807
    %2036 = vmatpush.msra.mxu0 %v806
    %2037 = vmatpush.msra.mxu0 %v805
    %2038 = vmatpush.msra.mxu0 %v804
    %2039 = vmatpush.msra.mxu0 %v803
    %2040 = vmatpush.msra.mxu0 %v802
    %2041 = vmatpush.msra.mxu0 %v801
    %2042 = vmatpush.msra.mxu0 %v800
    %2043 = vmatpush.msra.mxu0 %v799
    %2044 = vmatpush.msra.mxu0 %v798
    %2045 = vmatpush.msra.mxu0 %v797
    %2046 = vmatmul.f32.gmra.mxu0 %v1006
    %v2047 = vpop.f32.mrf.mxu0
    %v2048 = vadd.f32 %v2028, %v2047
    %2049 = vdwg.mxu0
    %2050 = vmatpush.msra.mxu0 %v828
    %2051 = vmatpush.msra.mxu0 %v827
    %2052 = vmatpush.msra.mxu0 %v826
    %2053 = vmatpush.msra.mxu0 %v825
    %2054 = vmatpush.msra.mxu0 %v824
    %2055 = vmatpush.msra.mxu0 %v823
    %2056 = vmatpush.msra.mxu0 %v822
    %2057 = vmatpush.msra.mxu0 %v821
    %2058 = vmatpush.msra.mxu0 %v820
    %2059 = vmatpush.msra.mxu0 %v819
    %2060 = vmatpush.msra.mxu0 %v818
    %2061 = vmatpush.msra.mxu0 %v817
    %2062 = vmatpush.msra.mxu0 %v816
    %2063 = vmatpush.msra.mxu0 %v815
    %2064 = vmatpush.msra.mxu0 %v814
    %2065 = vmatpush.msra.mxu0 %v813
    %2066 = vmatmul.f32.gmra.mxu0 %v1007
    %v2067 = vpop.f32.mrf.mxu0
    %v2068 = vadd.f32 %v2048, %v2067
    %2069 = vdwg.mxu0
    %2070 = vmatpush.msra.mxu0 %v844
    %2071 = vmatpush.msra.mxu0 %v843
    %2072 = vmatpush.msra.mxu0 %v842
    %2073 = vmatpush.msra.mxu0 %v841
    %2074 = vmatpush.msra.mxu0 %v840
    %2075 = vmatpush.msra.mxu0 %v839
    %2076 = vmatpush.msra.mxu0 %v838
    %2077 = vmatpush.msra.mxu0 %v837
    %2078 = vmatpush.msra.mxu0 %v836
    %2079 = vmatpush.msra.mxu0 %v835
    %2080 = vmatpush.msra.mxu0 %v834
    %2081 = vmatpush.msra.mxu0 %v833
    %2082 = vmatpush.msra.mxu0 %v832
    %2083 = vmatpush.msra.mxu0 %v831
    %2084 = vmatpush.msra.mxu0 %v830
    %2085 = vmatpush.msra.mxu0 %v829
    %2086 = vmatmul.f32.gmra.mxu0 %v1008
    %v2087 = vpop.f32.mrf.mxu0
    %v2088 = vadd.f32 %v2068, %v2087
    %2089 = vdwg.mxu0
    %2090 = vmatpush.msra.mxu0 %v860
    %2091 = vmatpush.msra.mxu0 %v859
    %2092 = vmatpush.msra.mxu0 %v858
    %2093 = vmatpush.msra.mxu0 %v857
    %2094 = vmatpush.msra.mxu0 %v856
    %2095 = vmatpush.msra.mxu0 %v855
    %2096 = vmatpush.msra.mxu0 %v854
    %2097 = vmatpush.msra.mxu0 %v853
    %2098 = vmatpush.msra.mxu0 %v852
    %2099 = vmatpush.msra.mxu0 %v851
    %2100 = vmatpush.msra.mxu0 %v850
    %2101 = vmatpush.msra.mxu0 %v849
    %2102 = vmatpush.msra.mxu0 %v848
    %2103 = vmatpush.msra.mxu0 %v847
    %2104 = vmatpush.msra.mxu0 %v846
    %2105 = vmatpush.msra.mxu0 %v845
    %2106 = vmatmul.f32.gmra.mxu0 %v1009
    %v2107 = vpop.f32.mrf.mxu0
    %v2108 = vadd.f32 %v2088, %v2107
    %2109 = vdwg.mxu0
    %2110 = vmatpush.msra.mxu0 %v876
    %2111 = vmatpush.msra.mxu0 %v875
    %2112 = vmatpush.msra.mxu0 %v874
    %2113 = vmatpush.msra.mxu0 %v873
    %2114 = vmatpush.msra.mxu0 %v872
    %2115 = vmatpush.msra.mxu0 %v871
    %2116 = vmatpush.msra.mxu0 %v870
    %2117 = vmatpush.msra.mxu0 %v869
    %2118 = vmatpush.msra.mxu0 %v868
    %2119 = vmatpush.msra.mxu0 %v867
    %2120 = vmatpush.msra.mxu0 %v866
    %2121 = vmatpush.msra.mxu0 %v865
    %2122 = vmatpush.msra.mxu0 %v864
    %2123 = vmatpush.msra.mxu0 %v863
    %2124 = vmatpush.msra.mxu0 %v862
    %2125 = vmatpush.msra.mxu0 %v861
    %2126 = vmatmul.f32.gmra.mxu0 %v1010
    %v2127 = vpop.f32.mrf.mxu0
    %v2128 = vadd.f32 %v2108, %v2127
    %2129 = vdwg.mxu0
    %2130 = vmatpush.msra.mxu0 %v892
    %2131 = vmatpush.msra.mxu0 %v891
    %2132 = vmatpush.msra.mxu0 %v890
    %2133 = vmatpush.msra.mxu0 %v889
    %2134 = vmatpush.msra.mxu0 %v888
    %2135 = vmatpush.msra.mxu0 %v887
    %2136 = vmatpush.msra.mxu0 %v886
    %2137 = vmatpush.msra.mxu0 %v885
    %2138 = vmatpush.msra.mxu0 %v884
    %2139 = vmatpush.msra.mxu0 %v883
    %2140 = vmatpush.msra.mxu0 %v882
    %2141 = vmatpush.msra.mxu0 %v881
    %2142 = vmatpush.msra.mxu0 %v880
    %2143 = vmatpush.msra.mxu0 %v879
    %2144 = vmatpush.msra.mxu0 %v878
    %2145 = vmatpush.msra.mxu0 %v877
    %2146 = vmatmul.f32.gmra.mxu0 %v1011
    %v2147 = vpop.f32.mrf.mxu0
    %v2148 = vadd.f32 %v2128, %v2147
    %2149 = vdwg.mxu0
    %2150 = vmatpush.msra.mxu0 %v908
    %2151 = vmatpush.msra.mxu0 %v907
    %2152 = vmatpush.msra.mxu0 %v906
    %2153 = vmatpush.msra.mxu0 %v905
    %2154 = vmatpush.msra.mxu0 %v904
    %2155 = vmatpush.msra.mxu0 %v903
    %2156 = vmatpush.msra.mxu0 %v902
    %2157 = vmatpush.msra.mxu0 %v901
    %2158 = vmatpush.msra.mxu0 %v900
    %2159 = vmatpush.msra.mxu0 %v899
    %2160 = vmatpush.msra.mxu0 %v898
    %2161 = vmatpush.msra.mxu0 %v897
    %2162 = vmatpush.msra.mxu0 %v896
    %2163 = vmatpush.msra.mxu0 %v895
    %2164 = vmatpush.msra.mxu0 %v894
    %2165 = vmatpush.msra.mxu0 %v893
    %2166 = vmatmul.f32.gmra.mxu0 %v1012
    %v2167 = vpop.f32.mrf.mxu0
    %v2168 = vadd.f32 %v2148, %v2167
    %2169 = vdwg.mxu0
    %2170 = vmatpush.msra.mxu0 %v924
    %2171 = vmatpush.msra.mxu0 %v923
    %2172 = vmatpush.msra.mxu0 %v922
    %2173 = vmatpush.msra.mxu0 %v921
    %2174 = vmatpush.msra.mxu0 %v920
    %2175 = vmatpush.msra.mxu0 %v919
    %2176 = vmatpush.msra.mxu0 %v918
    %2177 = vmatpush.msra.mxu0 %v917
    %2178 = vmatpush.msra.mxu0 %v916
    %2179 = vmatpush.msra.mxu0 %v915
    %2180 = vmatpush.msra.mxu0 %v914
    %2181 = vmatpush.msra.mxu0 %v913
    %2182 = vmatpush.msra.mxu0 %v912
    %2183 = vmatpush.msra.mxu0 %v911
    %2184 = vmatpush.msra.mxu0 %v910
    %2185 = vmatpush.msra.mxu0 %v909
    %2186 = vmatmul.f32.gmra.mxu0 %v1013
    %v2187 = vpop.f32.mrf.mxu0
    %v2188 = vadd.f32 %v2168, %v2187
    %2189 = vdwg.mxu0
    %vm2190 = vcmask 9216
    %2191 = vst.msk [vmem:[#allocation2] sm:$0x3] %vm2190, %v2188
    // Predicated region
    $region14: #{efficient_suppression_head.1} parent=1 // pred_check
      _
    $region15: #{efficient_suppression_head.1} parent=1 // pred_check_branch
      %2193 = sbr.rel (0) target = $region17
    $region16: #{efficient_suppression_head.1} parent=1 // pred_region
      %2195 = vsyncadd [#allocation3], 0
      %s2197 = sshll.u32 [#allocation2], 4
      %s2198 = int_to_ptr.vmem [resolvable:$true] %s2197
      %s2199 = sshll.u32 %s3, 4
      %s2200 = int_to_ptr.hbm [resolvable:$true] %s2199
      %2202 = dma.vmem_to_hbm [thread:$0]  %s2198, 32, %s2200, [#allocation3]
    $region17: #{efficient_suppression_head.1} parent=1 // pred_fallthru
      _
    // Predicated region
    $region18: #{efficient_suppression_head.1} parent=1 // pred_check
      _
    $region19: #{efficient_suppression_head.1} parent=1 // pred_check_branch
      %2204 = sbr.rel (0) target = $region21
    $region20: #{efficient_suppression_head.1} parent=1 // pred_region
      %2206 = dma.done [#allocation3], 32
    $region21: #{efficient_suppression_head.1} parent=1 // pred_fallthru
      _
    %2207 = vsyncpa [#allocation3], 1

</llo_original>
